<compile_context>
chip_gen: v6e
topology: v6e:2x2x1
jax: 0.10.0
libtpu: 0.0.40
codegen_flags: <defaults>
</compile_context>

<pallas_src>
import jax
import jax.numpy as jnp
from jax.experimental import pallas as pl
from jax.experimental.pallas import tpu as pltpu


# ----------------------------- main STRN forward kernel ----------------------

def _strn_kernel(h0_ref, vb_ref, view_t_ref, wslab_ref, bslab_ref, out_ref):
    f32 = jnp.float32
    bf16 = jnp.bfloat16
    H = vb_ref.shape[-1]            # 256
    Nv = view_t_ref.shape[1]        # n_view_cells (lane-dense)
    RA = Nv + 128                   # relation cols + 128-padded act column block

    # w2c layer 1: wdist part precomputed as h0 (wrapper), v part precomputed as vb
    h = jnp.maximum(h0_ref[...] + vb_ref[0], 0.0)                          # (TW, 256)

    # w2c layer 2
    h = jnp.dot(h.astype(bf16), wslab_ref[:, 0:H],
                preferred_element_type=f32) + bslab_ref[:, 0:H]
    h = jnp.maximum(h, 0.0)

    # fused (w2c layer 3 . fc1) -> ReLU
    g = jnp.dot(h.astype(bf16), wslab_ref[:, H:2 * H],
                preferred_element_type=f32) + bslab_ref[:, H:2 * H]
    g = jnp.maximum(g, 0.0)

    # fc2 -> ReLU
    g = jnp.dot(g.astype(bf16), wslab_ref[:, 2 * H:3 * H],
                preferred_element_type=f32) + bslab_ref[:, 2 * H:3 * H]
    g = jnp.maximum(g, 0.0)                                                # (TW, 256)

    # fused relation (fc_emb folded into vs_embedding^T) | fc_act (padded column)
    ra = jnp.dot(g.astype(bf16), wslab_ref[:, 3 * H:3 * H + RA],
                 preferred_element_type=f32) + bslab_ref[:, 3 * H:3 * H + RA]
    rel = ra[:, :Nv]                                                       # (TW, Nv)
    a = ra[:, Nv:Nv + 1]                                                   # (TW, 1)

    # softmax over view cells fused with the sigmoid activation gate:
    #   route = softmax(rel) * sigmoid(a) = e * 1/((1 + exp(-a)) * sum(e))
    m = jnp.max(rel, axis=-1, keepdims=True)
    e = jnp.exp(rel - m)
    gate = pl.reciprocal((1.0 + jnp.exp(-a)) * jnp.sum(e, axis=-1, keepdims=True),
                         approx=True)                                      # (TW, 1)
    route = e * gate                                                       # (TW, Nv)

    # wrd_cell^T tile: route @ view^T : (TW, Nv) x (Nv, C) -> (TW, C) (lane-dense vst)
    out = jnp.dot(route.astype(bf16), view_t_ref[0], preferred_element_type=f32)
    out_ref[0] = out.astype(out_ref.dtype)


def strn_forward(view_cell, v, wdist, vcode, params, vse_params, tw=None,
                 output_layout="bcn"):
    hp = jax.lax.Precision.HIGHEST
    f32, bf16 = jnp.float32, jnp.bfloat16
    B, C, Nv = view_cell.shape
    Nw = wdist.shape[0]

    (w1a, w1b, b1, w2, b2, w3, b3,
     f1w, f1b, f2w, f2b, faw, fab, few, feb) = params
    vse1_w, vse1_b, vse2_w, vse2_b = vse_params
    H = w1a.shape[1]                                  # 256

    # Cap TW at 256 if Nw grows (keeps (TW,256) f32 intermediates out of spill range).
    TW = (Nw if Nw <= 256 else 256) if tw is None else tw
    assert Nw % TW == 0

    # ---- host-side prep (plain JAX; everything except vb is batch-independent) ----
    # first w2c layer: wdist part hoisted fully, v part hoisted to a per-batch bias
    h0 = jnp.dot(wdist, w1a, precision=hp)                        # (Nw, 256)
    vb = (jnp.dot(v, w1b, precision=hp) + b1).reshape(B, 1, H)    # (B, 1, 256)
    # fold w2c third layer into fc1 (no nonlinearity between them)
    w23 = jnp.dot(w3, f1w, precision=hp)                          # (256, 256)
    b23 = jnp.dot(b3, f1w, precision=hp) + f1b                    # (1, 256)
    # view-space embedding MLP, then fold fc_emb into it:
    #   rel = (g @ few + feb) @ vs^T = g @ (few @ vs^T) + feb @ vs^T
    vs = jnp.dot(jax.nn.relu(jnp.dot(vcode, vse1_w, precision=hp) + vse1_b),
                 vse2_w, precision=hp) + vse2_b                   # (Nv, E)
    vs_t = jnp.transpose(vs)                                      # (E, Nv)
    w_rel = jnp.dot(few, vs_t, precision=hp)                      # (256, Nv)
    b_rel = jnp.dot(feb, vs_t, precision=hp)                      # (1, Nv)
    # fc_act as a zero-padded 128-lane column block behind the relation columns
    w_act = jnp.pad(faw, ((0, 0), (0, 127)))                      # (256, 128)
    b_act = jnp.pad(fab, ((0, 0), (0, 127)))                      # (1, 128)

    # one bf16 weight slab + one f32 bias slab (2 DMAs instead of 9)
    wslab = jnp.concatenate([w2, w23, f2w, w_rel, w_act], axis=1).astype(bf16)
    bslab = jnp.concatenate([b2, b23, f2b, b_rel, b_act], axis=1).astype(f32)
    WS = wslab.shape[1]                                           # 3*256 + Nv + 128

    # lane-dense layout for the final contraction and the output store
    view_t = jnp.transpose(view_cell, (0, 2, 1)).astype(bf16)     # (B, Nv, C)

    grid_spec = pltpu.PrefetchScalarGridSpec(
        num_scalar_prefetch=0,
        grid=(B, Nw // TW),
        in_specs=[
            pl.BlockSpec((TW, H), lambda b, w: (w, 0)),           # h0 tile
            pl.BlockSpec((1, 1, H), lambda b, w: (b, 0, 0)),      # per-batch v-bias
            pl.BlockSpec((1, Nv, C), lambda b, w: (b, 0, 0)),     # view_cell^T (bf16)
            pl.BlockSpec((H, WS), lambda b, w: (0, 0)),           # packed weights (bf16)
            pl.BlockSpec((1, WS), lambda b, w: (0, 0)),           # packed biases (f32)
        ],
        out_specs=pl.BlockSpec((1, TW, C), lambda b, w: (b, w, 0)),
    )

    out_t = pl.pallas_call(
        _strn_kernel,
        out_shape=jax.ShapeDtypeStruct((B, Nw, C), view_cell.dtype),
        grid_spec=grid_spec,
        compiler_params=pltpu.CompilerParams(
            dimension_semantics=("parallel", "parallel")),
    )(h0, vb, view_t, wslab, bslab)

    if output_layout == "bnc":
        return out_t                           # (B, Nw, C): skip the back-transpose
    return jnp.transpose(out_t, (0, 2, 1))     # PyTorch layout (B, C, Nw)


# ----------------------------- plain-JAX reference ---------------------------

def strn_ref(view_cell, v, wdist, vcode, params, vse_params):
    hp = jax.lax.Precision.HIGHEST
    (w1a, w1b, b1, w2, b2, w3, b3,
     f1w, f1b, f2w, f2b, faw, fab, few, feb) = params
    vse1_w, vse1_b, vse2_w, vse2_b = vse_params

    B, Nw = v.shape[0], wdist.shape[0]
    w1 = jnp.concatenate([w1a, w1b], axis=0)
    x = jnp.concatenate(
        [jnp.broadcast_to(wdist[None], (B, Nw, wdist.shape[1])),
         jnp.broadcast_to(v[:, None, :], (B, Nw, v.shape[1]))], axis=2
    ).reshape(B * Nw, -1)

    def lin(x, w, b):
        return jnp.dot(x, w, precision=hp) + b

    h = jax.nn.relu(lin(x, w1, b1))
    h = jax.nn.relu(lin(h, w2, b2))
    wcode = lin(h, w3, b3)
    g = jax.nn.relu(lin(wcode, f1w, f1b))
    g = jax.nn.relu(lin(g, f2w, f2b))
    act = jax.nn.sigmoid(lin(g, faw, fab)).reshape(B, Nw, 1)
    cs = lin(g, few, feb).reshape(B, Nw, -1)

    vs = lin(jax.nn.relu(lin(vcode, vse1_w, vse1_b)), vse2_w, vse2_b)   # (Nv, E)
    rel = jnp.einsum('bne,ve->bnv', cs, vs, precision=hp)
    dist = jax.nn.softmax(rel, axis=2)
    route = dist * act
    return jnp.einsum('bcv,bnv->bcn', view_cell, route, precision=hp)


# ----------------------------- setup / main -----------------------------------

def init_linear(key, fan_in, fan_out):
    kw, kb = jax.random.split(key)
    bound = 1.0 / (fan_in ** 0.5)
    w = jax.random.uniform(kw, (fan_in, fan_out), jnp.float32, -bound, bound)
    b = jax.random.uniform(kb, (1, fan_out), jnp.float32, -bound, bound)
    return w, b


if __name__ == "__main__":
    # module hyper-params (small but consistent with STRN defaults)
    B = 2
    n_wrd_cells = 64
    view_size = (16, 16)
    n_view_cells = view_size[0] * view_size[1]   # 256
    vsize, wdist_size, wcode_size = 7, 6, 3
    emb_size, csize = 32, 128

    key = jax.random.PRNGKey(0)
    ks = jax.random.split(key, 12)

    # persistent buffer: wdist ~ U(-1, 1)  (sample_wdist(dist='uniform'))
    wdist = jax.random.uniform(ks[0], (n_wrd_cells, wdist_size), jnp.float32, -1.0, 1.0)

    # parameters (weights stored as (in, out), biases as (1, out))
    w2c1_w, w2c1_b = init_linear(ks[1], wdist_size + vsize, 256)
    w2c2_w, w2c2_b = init_linear(ks[2], 256, 256)
    w2c3_w, w2c3_b = init_linear(ks[3], 256, wcode_size)
    fc1_w, fc1_b = init_linear(ks[4], wcode_size, 256)
    fc2_w, fc2_b = init_linear(ks[5], 256, 256)
    fca_w, fca_b = init_linear(ks[6], 256, 1)
    fce_w, fce_b = init_linear(ks[7], 256, emb_size)
    vse1_w, vse1_b = init_linear(ks[8], 2, 128)
    vse2_w, vse2_b = init_linear(ks[9], 128, emb_size)

    # split first w2c layer into wdist-part and v-part (v-part hoisted to a bias)
    w1a, w1b = w2c1_w[:wdist_size], w2c1_w[wdist_size:]
    params = (w1a, w1b, w2c1_b, w2c2_w, w2c2_b, w2c3_w, w2c3_b,
              fc1_w, fc1_b, fc2_w, fc2_b, fca_w, fca_b, fce_w, fce_b)
    vse_params = (vse1_w, vse1_b, vse2_w, vse2_b)

    # inputs
    view_cell = jax.random.normal(ks[10], (B, csize, n_view_cells), jnp.float32)
    v = jax.random.normal(ks[11], (B, vsize), jnp.float32)

    # vcode grid (torch.meshgrid default 'ij' indexing)
    xs = jnp.linspace(-1.0, 1.0, view_size[0])
    ys = jnp.linspace(-1.0, 1.0, view_size[1])
    xg, yg = jnp.meshgrid(xs, ys, indexing='ij')
    vcode = jnp.stack([xg, yg], axis=0).reshape(2, -1).T.astype(jnp.float32)  # (256, 2)

    # run Pallas kernel
    wrd_cell = strn_forward(view_cell, v, wdist, vcode, params, vse_params)
    wrd_cell = jax.block_until_ready(wrd_cell)

    assert wrd_cell.shape == (B, csize, n_wrd_cells), wrd_cell.shape

    # correctness check vs plain-JAX reference
    ref = strn_ref(view_cell, v, wdist, vcode, params, vse_params)
    assert jnp.allclose(wrd_cell, ref, rtol=2e-2, atol=2e-2), \
        float(jnp.max(jnp.abs(wrd_cell - ref)))

    print("KERNEL_OK")
</pallas_src>

<mosaic_0001>
module attributes {stable_mosaic.version = 11 : i64} {
  func.func @_strn_kernel(%arg0: i32, %arg1: i32, %arg2: memref<64x256xf32, #tpu.memory_space<vmem>>, %arg3: memref<1x1x256xf32, #tpu.memory_space<vmem>>, %arg4: memref<1x256x128xbf16, #tpu.memory_space<vmem>>, %arg5: memref<256x1152xbf16, #tpu.memory_space<vmem>>, %arg6: memref<1x1152xf32, #tpu.memory_space<vmem>>, %arg7: memref<1x64x128xf32, #tpu.memory_space<vmem>>) attributes {dimension_semantics = [#tpu.dimension_semantics<parallel>, #tpu.dimension_semantics<parallel>], iteration_bounds = array<i64: 2, 1>, scalar_prefetch = 0 : i64, scratch_operands = 0 : i64, tpu.core_type = #tpu.core_type<tc>, window_params = [{transform_indices = @transform_0, window_bounds = array<i64: 64, 256>}, {transform_indices = @transform_1, window_bounds = array<i64: 1, 1, 256>}, {transform_indices = @transform_2, window_bounds = array<i64: 1, 256, 128>}, {pipeline_mode = #tpu.pipeline_mode<synchronous>, transform_indices = @transform_3, window_bounds = array<i64: 256, 1152>}, {pipeline_mode = #tpu.pipeline_mode<synchronous>, transform_indices = @transform_4, window_bounds = array<i64: 1, 1152>}, {transform_indices = @transform_5, window_bounds = array<i64: 1, 64, 128>}]} {
    %c0 = arith.constant 0 : index
    %c0_0 = arith.constant 0 : index
    %0 = vector.load %arg2[%c0, %c0_0] : memref<64x256xf32, #tpu.memory_space<vmem>>, vector<64x256xf32>
    %c0_1 = arith.constant 0 : index
    %c0_2 = arith.constant 0 : index
    %c0_3 = arith.constant 0 : index
    %1 = vector.load %arg3[%c0_1, %c0_2, %c0_3] : memref<1x1x256xf32, #tpu.memory_space<vmem>>, vector<1x1x256xf32>
    %2 = vector.shape_cast %1 : vector<1x1x256xf32> to vector<1x256xf32>
    %3 = vector.broadcast %2 : vector<1x256xf32> to vector<64x256xf32>
    %4 = arith.addf %0, %3 : vector<64x256xf32>
    %cst = arith.constant 0.000000e+00 : f32
    %5 = vector.broadcast %cst : f32 to vector<64x256xf32>
    %6 = arith.maximumf %4, %5 : vector<64x256xf32>
    %7 = arith.truncf %6 : vector<64x256xf32> to vector<64x256xbf16>
    %c0_4 = arith.constant 0 : index
    %c0_5 = arith.constant 0 : index
    %8 = vector.load %arg5[%c0_4, %c0_5] : memref<256x1152xbf16, #tpu.memory_space<vmem>>, vector<256x256xbf16>
    %cst_6 = arith.constant dense<0.000000e+00> : vector<64x256xf32>
    %9 = tpu.matmul %7, %8, %cst_6 {dimension_numbers = #tpu.dot_dimension_numbers<[1], [0], [0], [1], [0, 0, 1, 1], [], []>} : vector<64x256xbf16>, vector<256x256xbf16>, vector<64x256xf32> -> vector<64x256xf32>
    %c0_7 = arith.constant 0 : index
    %c0_8 = arith.constant 0 : index
    %10 = vector.load %arg6[%c0_7, %c0_8] : memref<1x1152xf32, #tpu.memory_space<vmem>>, vector<1x256xf32>
    %11 = vector.broadcast %10 : vector<1x256xf32> to vector<64x256xf32>
    %12 = arith.addf %9, %11 : vector<64x256xf32>
    %cst_9 = arith.constant 0.000000e+00 : f32
    %13 = vector.broadcast %cst_9 : f32 to vector<64x256xf32>
    %14 = arith.maximumf %12, %13 : vector<64x256xf32>
    %15 = arith.truncf %14 : vector<64x256xf32> to vector<64x256xbf16>
    %c0_10 = arith.constant 0 : index
    %c256 = arith.constant 256 : index
    %16 = vector.load %arg5[%c0_10, %c256] : memref<256x1152xbf16, #tpu.memory_space<vmem>>, vector<256x256xbf16>
    %cst_11 = arith.constant dense<0.000000e+00> : vector<64x256xf32>
    %17 = tpu.matmul %15, %16, %cst_11 {dimension_numbers = #tpu.dot_dimension_numbers<[1], [0], [0], [1], [0, 0, 1, 1], [], []>} : vector<64x256xbf16>, vector<256x256xbf16>, vector<64x256xf32> -> vector<64x256xf32>
    %c0_12 = arith.constant 0 : index
    %c256_13 = arith.constant 256 : index
    %18 = vector.load %arg6[%c0_12, %c256_13] : memref<1x1152xf32, #tpu.memory_space<vmem>>, vector<1x256xf32>
    %19 = vector.broadcast %18 : vector<1x256xf32> to vector<64x256xf32>
    %20 = arith.addf %17, %19 : vector<64x256xf32>
    %cst_14 = arith.constant 0.000000e+00 : f32
    %21 = vector.broadcast %cst_14 : f32 to vector<64x256xf32>
    %22 = arith.maximumf %20, %21 : vector<64x256xf32>
    %23 = arith.truncf %22 : vector<64x256xf32> to vector<64x256xbf16>
    %c0_15 = arith.constant 0 : index
    %c512 = arith.constant 512 : index
    %24 = vector.load %arg5[%c0_15, %c512] : memref<256x1152xbf16, #tpu.memory_space<vmem>>, vector<256x256xbf16>
    %cst_16 = arith.constant dense<0.000000e+00> : vector<64x256xf32>
    %25 = tpu.matmul %23, %24, %cst_16 {dimension_numbers = #tpu.dot_dimension_numbers<[1], [0], [0], [1], [0, 0, 1, 1], [], []>} : vector<64x256xbf16>, vector<256x256xbf16>, vector<64x256xf32> -> vector<64x256xf32>
    %c0_17 = arith.constant 0 : index
    %c512_18 = arith.constant 512 : index
    %26 = vector.load %arg6[%c0_17, %c512_18] : memref<1x1152xf32, #tpu.memory_space<vmem>>, vector<1x256xf32>
    %27 = vector.broadcast %26 : vector<1x256xf32> to vector<64x256xf32>
    %28 = arith.addf %25, %27 : vector<64x256xf32>
    %cst_19 = arith.constant 0.000000e+00 : f32
    %29 = vector.broadcast %cst_19 : f32 to vector<64x256xf32>
    %30 = arith.maximumf %28, %29 : vector<64x256xf32>
    %31 = arith.truncf %30 : vector<64x256xf32> to vector<64x256xbf16>
    %c0_20 = arith.constant 0 : index
    %c768 = arith.constant 768 : index
    %32 = vector.load %arg5[%c0_20, %c768] : memref<256x1152xbf16, #tpu.memory_space<vmem>>, vector<256x384xbf16>
    %cst_21 = arith.constant dense<0.000000e+00> : vector<64x384xf32>
    %33 = tpu.matmul %31, %32, %cst_21 {dimension_numbers = #tpu.dot_dimension_numbers<[1], [0], [0], [1], [0, 0, 1, 1], [], []>} : vector<64x256xbf16>, vector<256x384xbf16>, vector<64x384xf32> -> vector<64x384xf32>
    %c0_22 = arith.constant 0 : index
    %c768_23 = arith.constant 768 : index
    %34 = vector.load %arg6[%c0_22, %c768_23] : memref<1x1152xf32, #tpu.memory_space<vmem>>, vector<1x384xf32>
    %35 = vector.broadcast %34 : vector<1x384xf32> to vector<64x384xf32>
    %36 = arith.addf %33, %35 : vector<64x384xf32>
    %37 = vector.extract_strided_slice %36 {offsets = [0, 0], sizes = [64, 256], strides = [1, 1]} : vector<64x384xf32> to vector<64x256xf32>
    %38 = vector.extract_strided_slice %36 {offsets = [0, 256], sizes = [64, 1], strides = [1, 1]} : vector<64x384xf32> to vector<64x1xf32>
    %cst_24 = arith.constant dense<0xFF800000> : vector<64xf32>
    %39 = vector.multi_reduction <maximumf>, %37, %cst_24 [1] : vector<64x256xf32> to vector<64xf32>
    %40 = vector.shape_cast %39 : vector<64xf32> to vector<64x1xf32>
    %41 = vector.broadcast %40 : vector<64x1xf32> to vector<64x256xf32>
    %42 = arith.subf %37, %41 : vector<64x256xf32>
    %43 = math.exp %42 : vector<64x256xf32>
    %cst_25 = arith.constant 0.000000e+00 : f32
    %44 = vector.broadcast %cst_25 : f32 to vector<64x1xf32>
    %45 = arith.subf %44, %38 : vector<64x1xf32>
    %46 = math.exp %45 : vector<64x1xf32>
    %cst_26 = arith.constant 1.000000e+00 : f32
    %47 = vector.broadcast %cst_26 : f32 to vector<64x1xf32>
    %48 = arith.addf %47, %46 : vector<64x1xf32>
    %cst_27 = arith.constant dense<0.000000e+00> : vector<64xf32>
    %49 = vector.multi_reduction <add>, %43, %cst_27 [1] : vector<64x256xf32> to vector<64xf32>
    %50 = vector.shape_cast %49 : vector<64xf32> to vector<64x1xf32>
    %51 = arith.mulf %48, %50 : vector<64x1xf32>
    %52 = tpu.reciprocal %51 {approx = true} : vector<64x1xf32> -> vector<64x1xf32>
    %53 = vector.broadcast %52 : vector<64x1xf32> to vector<64x256xf32>
    %54 = arith.mulf %43, %53 : vector<64x256xf32>
    %55 = arith.truncf %54 : vector<64x256xf32> to vector<64x256xbf16>
    %c0_28 = arith.constant 0 : index
    %c0_29 = arith.constant 0 : index
    %c0_30 = arith.constant 0 : index
    %56 = vector.load %arg4[%c0_28, %c0_29, %c0_30] : memref<1x256x128xbf16, #tpu.memory_space<vmem>>, vector<1x256x128xbf16>
    %57 = vector.shape_cast %56 : vector<1x256x128xbf16> to vector<256x128xbf16>
    %cst_31 = arith.constant dense<0.000000e+00> : vector<64x128xf32>
    %58 = tpu.matmul %55, %57, %cst_31 {dimension_numbers = #tpu.dot_dimension_numbers<[1], [0], [0], [1], [0, 0, 1, 1], [], []>} : vector<64x256xbf16>, vector<256x128xbf16>, vector<64x128xf32> -> vector<64x128xf32>
    %c0_32 = arith.constant 0 : index
    %c0_33 = arith.constant 0 : index
    %c0_34 = arith.constant 0 : index
    %59 = vector.load %arg7[%c0_32, %c0_33, %c0_34] : memref<1x64x128xf32, #tpu.memory_space<vmem>>, vector<1x64x128xf32>
    %60 = vector.shape_cast %59 : vector<1x64x128xf32> to vector<64x128xf32>
    %61 = vector.shape_cast %58 : vector<64x128xf32> to vector<1x64x128xf32>
    tpu.vector_store %arg7[%c0_32, %c0_33, %c0_34], %61 {strides = array<i32>} : memref<1x64x128xf32, #tpu.memory_space<vmem>>, vector<1x64x128xf32>,
    return
  }
  func.func @transform_0(%arg0: i32, %arg1: i32) -> (i32, i32) {
    %c0_i32 = arith.constant 0 : i32
    %c0_i32_0 = arith.constant 0 : i32
    return %arg1, %c0_i32 : i32, i32
  }
  func.func @transform_1(%arg0: i32, %arg1: i32) -> (i32, i32, i32) {
    %c0_i32 = arith.constant 0 : i32
    %c0_i32_0 = arith.constant 0 : i32
    %c0_i32_1 = arith.constant 0 : i32
    return %arg0, %c0_i32, %c0_i32_0 : i32, i32, i32
  }
  func.func @transform_2(%arg0: i32, %arg1: i32) -> (i32, i32, i32) {
    %c0_i32 = arith.constant 0 : i32
    %c0_i32_0 = arith.constant 0 : i32
    %c0_i32_1 = arith.constant 0 : i32
    return %arg0, %c0_i32, %c0_i32_0 : i32, i32, i32
  }
  func.func @transform_3(%arg0: i32, %arg1: i32) -> (i32, i32) {
    %c0_i32 = arith.constant 0 : i32
    %c0_i32_0 = arith.constant 0 : i32
    %c0_i32_1 = arith.constant 0 : i32
    return %c0_i32, %c0_i32_0 : i32, i32
  }
  func.func @transform_4(%arg0: i32, %arg1: i32) -> (i32, i32) {
    %c0_i32 = arith.constant 0 : i32
    %c0_i32_0 = arith.constant 0 : i32
    %c0_i32_1 = arith.constant 0 : i32
    return %c0_i32, %c0_i32_0 : i32, i32
  }
  func.func @transform_5(%arg0: i32, %arg1: i32) -> (i32, i32, i32) {
    %c0_i32 = arith.constant 0 : i32
    %c0_i32_0 = arith.constant 0 : i32
    return %arg0, %arg1, %c0_i32 : i32, i32, i32
  }
}

</mosaic_0001>

<llo_original>
// kernel: tpu_custom_call.1
$region0: #{tpu_custom_call.1}
  #allocation0 [shape = 'u32[]', space=smem, size = 0x4, offset = 0x4, fixed_abs, tag = 'smem constant byte address 0x4 - core index']
  #allocation1 [shape = 'u32[144,128]{1,0:T(1,128)}', space=vmem, size = 0x12000, scoped, tag = 'internal scratch']
  %s0 = inlined_call_operand.hbm [shape: f32[64,256], index: 0, kind: input, shape index: {}]
  %s1 = inlined_call_operand.hbm [shape: f32[2,1,256], index: 1, kind: input, shape index: {}]
  %s2 = inlined_call_operand.hbm [shape: bf16[2,256,128], index: 2, kind: input, shape index: {}]
  %s3 = inlined_call_operand.hbm [shape: bf16[256,1152], index: 3, kind: input, shape index: {}]
  %s4 = inlined_call_operand.hbm [shape: f32[1,1152], index: 4, kind: input, shape index: {}]
  %s5 = inlined_call_operand.hbm [shape: f32[2,64,128], index: 5, kind: output, shape index: {}]
  %s6 = sld [smem:[#allocation0]]
  $region73: #{tpu_custom_call.1} parent=0
    _
  %s8 = ssub.s32 1, %s6
  %s9 = scalar_select 0, %s8, %s6
  $region1: #{tpu_custom_call.1} parent=0
    #allocation2 [shape = 'u8[65536]{0}', space=vmem, size = 0x10000, scoped, tag = 'input window, operand 0, single buffered']
    #allocation3 [shape = 's32[2]{0}', space=sflag, size = 0x8, scoped, tag = 'scoped memory for tpu_custom_call.1']
    #allocation4 [shape = 's32[2]{0}', space=sflag, size = 0x8, scoped, tag = 'scoped memory for tpu_custom_call.1']
    #allocation5 [shape = 'u8[2048]{0}', space=vmem, size = 0x800, scoped, tag = 'input window, operand 1']
    #allocation6 [shape = 's32[2]{0}', space=sflag, size = 0x8, scoped, tag = 'scoped memory for tpu_custom_call.1']
    #allocation7 [shape = 'u8[131072]{0}', space=vmem, size = 0x20000, scoped, tag = 'input window, operand 2']
    #allocation8 [shape = 'u8[589824]{0}', space=vmem, size = 0x90000, scoped, tag = 'input window, operand 3, single buffered']
    #allocation9 [shape = 's32[1]{0}', space=sflag, size = 0x4, scoped, tag = 'scoped memory for tpu_custom_call.1']
    #allocation10 [shape = 'u8[4608]{0}', space=vmem, size = 0x1400, scoped, tag = 'input window, operand 4, single buffered']
    #allocation11 [shape = 'u8[65536]{0}', space=vmem, size = 0x10000, scoped, tag = 'output window, operand 0']
    %10 = vsyncpa [#allocation3], 0
    %11 = vsyncpa [#allocation6], 0
    %s12 = scalar_lea.sflag [#allocation6], 1
    %13 = vsyncpa %s12, 0
    %14 = vsyncpa [#allocation9], 0
    %15 = vsyncpa [#allocation4], 0
    %s16 = scalar_lea.sflag [#allocation4], 1
    %17 = vsyncpa %s16, 0
    loop: start=0, step=1, limit=4
    $region2: #{tpu_custom_call.1} parent=1 // loop_pre_header
      _
    $region3: #{tpu_custom_call.1} parent=1 // loop_header
      %s19 = sphi 0, %s23
      %p20 = scmp.ge.s32.totalorder %s19, 4
      %s26 = sphi 0, %s38
      %s27 = sphi 0, %s34
      %s28 = sphi 0, %s26
      %s29 = sphi 0, %s27
      %s30 = sphi 0, %s28
      %s31 = sphi 0, %s29
      %s41 = sphi 0, %s43
      %s44 = sphi 0, %s41
      %s45 = sphi 0, %s44
      %s61 = sphi 0, %s45
      %s67 = sphi 0, %s69
      %s70 = sphi 0, %s67
      %s71 = sphi 0, %s70
      %s87 = sphi 0, %s71
      %s93 = sphi 0, %s95
      %s96 = sphi 0, %s93
      %s97 = sphi 0, %s96
      %s113 = sphi 0, %s97
      %s117 = sphi 0, %s117
      %s119 = sphi 0, %s117
      %s120 = sphi 0, %s119
      %s134 = sphi 0, %s120
      %s138 = sphi 0, %s138
      %s140 = sphi 0, %s138
      %s141 = sphi 0, %s140
      %s155 = sphi 0, %s141
      %s163 = sphi 0, %s165
      %s166 = sphi 0, %s163
      %s167 = sphi 0, %s166
      %s183 = sphi 0, %s167
    $region4: #{tpu_custom_call.1} parent=1 // loop_header_branch
      %22 = sbr.rel (%p20) target = $region8
    $region5: #{tpu_custom_call.1} parent=1 // loop_body
      %s24 = ssub.s32 %s19, 1
      %s25 = ssub.s32 %s19, 2
      %s32 = sadd.s32 1, %s27
      %p33 = scmp.ge.s32.totalorder %s32, 1
      %s34 = scalar_select %p33, 0, %s32
      %s35 = sadd.s32 1, %s26
      %s36 = scalar_select %p33, %s35, %s26
      %p37 = scmp.ge.s32.totalorder %s36, 2
      %s38 = scalar_select %p37, 0, %s36
      %s39 = ssub.s32 %s27, %s34
      %p40 = scmp.eq.s32.totalorder %s39, 0
      %s42 = sadd.s32 %s41, 1
      %s43 = scalar_select %p40, %s41, %s42
      %p46 = pneg %p40
      %p47 = scmp.eq.s32.totalorder %s19, 1
      %p48 = por %p46, %p47
      %p49 = scmp.ne.s32.totalorder %s41, %s44
      %p50 = scmp.eq.s32.totalorder %s19, 0
      %p51 = por %p49, %p50
      %p52 = scmp.ne.s32.totalorder %s41, %s44
      %p53 = scmp.eq.s32.totalorder %s24, 1
      %p54 = por %p52, %p53
      %p55 = scmp.ne.s32.totalorder %s44, %s45
      %p56 = scmp.eq.s32.totalorder %s24, 0
      %p57 = por %p55, %p56
      %p58 = scmp.ne.s32.totalorder %s44, %s45
      %p59 = scmp.eq.s32.totalorder %s25, 1
      %p60 = por %p58, %p59
      %p62 = scmp.ne.s32.totalorder %s45, %s61
      %p63 = scmp.eq.s32.totalorder %s25, 0
      %p64 = por %p62, %p63
      %s65 = ssub.s32 %s26, %s38
      %p66 = scmp.eq.s32.totalorder %s65, 0
      %s68 = sadd.s32 %s67, 1
      %s69 = scalar_select %p66, %s67, %s68
      %p72 = pneg %p66
      %p73 = scmp.eq.s32.totalorder %s19, 1
      %p74 = por %p72, %p73
      %p75 = scmp.ne.s32.totalorder %s67, %s70
      %p76 = scmp.eq.s32.totalorder %s19, 0
      %p77 = por %p75, %p76
      %p78 = scmp.ne.s32.totalorder %s67, %s70
      %p79 = scmp.eq.s32.totalorder %s24, 1
      %p80 = por %p78, %p79
      %p81 = scmp.ne.s32.totalorder %s70, %s71
      %p82 = scmp.eq.s32.totalorder %s24, 0
      %p83 = por %p81, %p82
      %p84 = scmp.ne.s32.totalorder %s70, %s71
      %p85 = scmp.eq.s32.totalorder %s25, 1
      %p86 = por %p84, %p85
      %p88 = scmp.ne.s32.totalorder %s71, %s87
      %p89 = scmp.eq.s32.totalorder %s25, 0
      %p90 = por %p88, %p89
      %s91 = ssub.s32 %s26, %s38
      %p92 = scmp.eq.s32.totalorder %s91, 0
      %s94 = sadd.s32 %s93, 1
      %s95 = scalar_select %p92, %s93, %s94
      %p98 = pneg %p92
      %p99 = scmp.eq.s32.totalorder %s19, 1
      %p100 = por %p98, %p99
      %p101 = scmp.ne.s32.totalorder %s93, %s96
      %p102 = scmp.eq.s32.totalorder %s19, 0
      %p103 = por %p101, %p102
      %p104 = scmp.ne.s32.totalorder %s93, %s96
      %p105 = scmp.eq.s32.totalorder %s24, 1
      %p106 = por %p104, %p105
      %p107 = scmp.ne.s32.totalorder %s96, %s97
      %p108 = scmp.eq.s32.totalorder %s24, 0
      %p109 = por %p107, %p108
      %p110 = scmp.ne.s32.totalorder %s96, %s97
      %p111 = scmp.eq.s32.totalorder %s25, 1
      %p112 = por %p110, %p111
      %p114 = scmp.ne.s32.totalorder %s97, %s113
      %p115 = scmp.eq.s32.totalorder %s25, 0
      %p116 = por %p114, %p115
      %s118 = sadd.s32 %s117, 1
      %p121 = scmp.eq.s32.totalorder %s19, 1
      %p122 = scmp.ne.s32.totalorder %s117, %s119
      %p123 = scmp.eq.s32.totalorder %s19, 0
      %p124 = por %p122, %p123
      %p125 = scmp.ne.s32.totalorder %s117, %s119
      %p126 = scmp.eq.s32.totalorder %s24, 1
      %p127 = por %p125, %p126
      %p128 = scmp.ne.s32.totalorder %s119, %s120
      %p129 = scmp.eq.s32.totalorder %s24, 0
      %p130 = por %p128, %p129
      %p131 = scmp.ne.s32.totalorder %s119, %s120
      %p132 = scmp.eq.s32.totalorder %s25, 1
      %p133 = por %p131, %p132
      %p135 = scmp.ne.s32.totalorder %s120, %s134
      %p136 = scmp.eq.s32.totalorder %s25, 0
      %p137 = por %p135, %p136
      %s139 = sadd.s32 %s138, 1
      %p142 = scmp.eq.s32.totalorder %s19, 1
      %p143 = scmp.ne.s32.totalorder %s138, %s140
      %p144 = scmp.eq.s32.totalorder %s19, 0
      %p145 = por %p143, %p144
      %p146 = scmp.ne.s32.totalorder %s138, %s140
      %p147 = scmp.eq.s32.totalorder %s24, 1
      %p148 = por %p146, %p147
      %p149 = scmp.ne.s32.totalorder %s140, %s141
      %p150 = scmp.eq.s32.totalorder %s24, 0
      %p151 = por %p149, %p150
      %p152 = scmp.ne.s32.totalorder %s140, %s141
      %p153 = scmp.eq.s32.totalorder %s25, 1
      %p154 = por %p152, %p153
      %p156 = scmp.ne.s32.totalorder %s141, %s155
      %p157 = scmp.eq.s32.totalorder %s25, 0
      %p158 = por %p156, %p157
      %s159 = ssub.s32 %s26, %s38
      %s160 = ssub.s32 %s27, %s34
      %s161 = sor.u32 %s159, %s160
      %p162 = scmp.eq.s32.totalorder %s161, 0
      %s164 = sadd.s32 %s163, 1
      %s165 = scalar_select %p162, %s163, %s164
      %p168 = pneg %p162
      %p169 = scmp.eq.s32.totalorder %s19, 1
      %p170 = por %p168, %p169
      %p171 = scmp.ne.s32.totalorder %s163, %s166
      %p172 = scmp.eq.s32.totalorder %s19, 0
      %p173 = por %p171, %p172
      %p174 = scmp.ne.s32.totalorder %s163, %s166
      %p175 = scmp.eq.s32.totalorder %s24, 1
      %p176 = por %p174, %p175
      %p177 = scmp.ne.s32.totalorder %s166, %s167
      %p178 = scmp.eq.s32.totalorder %s24, 0
      %p179 = por %p177, %p178
      %p180 = scmp.ne.s32.totalorder %s166, %s167
      %p181 = scmp.eq.s32.totalorder %s25, 1
      %p182 = por %p180, %p181
      %p184 = scmp.ne.s32.totalorder %s167, %s183
      %p185 = scmp.eq.s32.totalorder %s25, 0
      %p186 = por %p184, %p185
      %p187 = scmp.le.s32.totalorder 1, %s19
      %p188 = scmp.lt.s32.totalorder %s19, 3
      %p189 = pnand %p187, %p188
      %p190 = pneg %p189
      // Predicated region
      $region9: #{tpu_custom_call.1} parent=5 // pred_check
        _
      $region10: #{tpu_custom_call.1} parent=5 // pred_check_branch
        %192 = sbr.rel (%p189) target = $region12
      $region11: #{tpu_custom_call.1} parent=5 // pred_region
        %s193 = ssub.s32 %s19, 1
        // Predicated region
        $region13: #{tpu_custom_call.1} parent=11 // pred_check
          %p194 = pneg %p57
        $region14: #{tpu_custom_call.1} parent=11 // pred_check_branch
          %196 = sbr.rel (%p194) target = $region16
        $region15: #{tpu_custom_call.1} parent=11 // pred_region
          %s197 = smul.u32 8, %s29
          %s199 = ssub.s32 2048, 2048
          %200 = vsyncadd [#allocation3], %s199
          %s201 = smul.addr %s197, 2
          %s202 = smul.addr %s201, 128
          %s203 = scalar_lea.hbm %s0, %s202
          %s204 = sshll.u32 [#allocation2], 4
          %s205 = int_to_ptr.vmem [resolvable:$true] %s204
          %210 = dma.hbm_to_vmem [thread:$0]  %s203, 2048, %s205, [#allocation3], 256, 256, 16
        $region16: #{tpu_custom_call.1} parent=11 // pred_fallthru
          _
        // Predicated region
        $region17: #{tpu_custom_call.1} parent=11 // pred_check
          %p211 = pneg %p130
        $region18: #{tpu_custom_call.1} parent=11 // pred_check_branch
          %213 = sbr.rel (%p211) target = $region20
        $region19: #{tpu_custom_call.1} parent=11 // pred_region
          %s215 = ssub.s32 18432, 18432
          %216 = vsyncadd [#allocation9], %s215
          %s217 = sshll.u32 [#allocation8], 4
          %s218 = int_to_ptr.vmem [resolvable:$true] %s217
          %223 = dma.hbm_to_vmem [thread:$0]  %s3, 18432, %s218, [#allocation9], 576, 576, 36
        $region20: #{tpu_custom_call.1} parent=11 // pred_fallthru
          _
        // Predicated region
        $region21: #{tpu_custom_call.1} parent=11 // pred_check
          %p224 = pneg %p151
        $region22: #{tpu_custom_call.1} parent=11 // pred_check_branch
          %226 = sbr.rel (%p224) target = $region24
        $region23: #{tpu_custom_call.1} parent=11 // pred_region
          %s228 = ssub.s32 144, 144
          %229 = vsyncadd [#allocation9], %s228
          %s231 = sshll.u32 [#allocation10], 4
          %s232 = int_to_ptr.vmem [resolvable:$true] %s231
          %234 = dma.hbm_to_vmem [thread:$0]  %s4, 144, %s232, [#allocation9]
        $region24: #{tpu_custom_call.1} parent=11 // pred_fallthru
          _
      $region12: #{tpu_custom_call.1} parent=5 // pred_fallthru
        _
      %p235 = scmp.lt.s32.totalorder %s19, 2
      // Predicated region
      $region25: #{tpu_custom_call.1} parent=5 // pred_check
        %p236 = pneg %p235
      $region26: #{tpu_custom_call.1} parent=5 // pred_check_branch
        %238 = sbr.rel (%p236) target = $region28
      $region27: #{tpu_custom_call.1} parent=5 // pred_region
        // Predicated region
        $region29: #{tpu_custom_call.1} parent=27 // pred_check
          %p239 = pneg %p77
        $region30: #{tpu_custom_call.1} parent=27 // pred_check_branch
          %241 = sbr.rel (%p239) target = $region32
        $region31: #{tpu_custom_call.1} parent=27 // pred_region
          %s242 = sand.u32 %s19, 1
          %s243 = scalar_lea.sflag [#allocation6], %s242
          %s244 = sand.u32 %s67, 1
          %s245 = smul.addr %s244, 2
          %s246 = scalar_lea.vmem [#allocation5], %s245
          %s248 = ssub.s32 32, 32
          %249 = vsyncadd %s243, %s248
          %s250 = smul.addr %s26, 2
          %s251 = smul.addr %s250, 16
          %s252 = scalar_lea.hbm %s1, %s251
          %s254 = sshll.u32 %s246, 4
          %s255 = int_to_ptr.vmem [resolvable:$true] %s254
          %257 = dma.hbm_to_vmem [thread:$0]  %s252, 32, %s255, %s243
        $region32: #{tpu_custom_call.1} parent=27 // pred_fallthru
          _
        // Predicated region
        $region33: #{tpu_custom_call.1} parent=27 // pred_check
          %p258 = pneg %p103
        $region34: #{tpu_custom_call.1} parent=27 // pred_check_branch
          %260 = sbr.rel (%p258) target = $region36
        $region35: #{tpu_custom_call.1} parent=27 // pred_region
          %s261 = sand.u32 %s19, 1
          %s262 = scalar_lea.sflag [#allocation6], %s261
          %s263 = sand.u32 %s93, 1
          %s264 = smul.addr %s263, 128
          %s265 = scalar_lea.vmem [#allocation7], %s264
          %s267 = ssub.s32 2048, 2048
          %268 = vsyncadd %s262, %s267
          %s269 = smul.addr %s26, 32
          %s270 = smul.addr %s269, 64
          %s271 = scalar_lea.hbm %s2, %s270
          %s272 = sshll.u32 %s265, 4
          %s273 = int_to_ptr.vmem [resolvable:$true] %s272
          %278 = dma.hbm_to_vmem [thread:$0]  %s271, 2048, %s273, %s262, 64, 64, 4
        $region36: #{tpu_custom_call.1} parent=27 // pred_fallthru
          _
      $region28: #{tpu_custom_call.1} parent=5 // pred_fallthru
        _
      %p279 = scmp.le.s32.totalorder 1, %s19
      %p280 = scmp.lt.s32.totalorder %s19, 3
      %p281 = pnand %p279, %p280
      %p282 = pneg %p281
      // Predicated region
      $region37: #{tpu_custom_call.1} parent=5 // pred_check
        _
      $region38: #{tpu_custom_call.1} parent=5 // pred_check_branch
        %284 = sbr.rel (%p281) target = $region40
      $region39: #{tpu_custom_call.1} parent=5 // pred_region
        %s285 = ssub.s32 %s19, 1
        // Predicated region
        $region41: #{tpu_custom_call.1} parent=39 // pred_check
          %p286 = pneg %p57
        $region42: #{tpu_custom_call.1} parent=39 // pred_check_branch
          %288 = sbr.rel (%p286) target = $region44
        $region43: #{tpu_custom_call.1} parent=39 // pred_region
          %289 = dma.done [#allocation3], 2048
        $region44: #{tpu_custom_call.1} parent=39 // pred_fallthru
          _
        %s290 = sand.u32 %s24, 1
        %s291 = scalar_lea.sflag [#allocation6], %s290
        %s292 = sand.u32 %s70, 1
        %s293 = smul.addr %s292, 2
        %s294 = scalar_lea.vmem [#allocation5], %s293
        // Predicated region
        $region45: #{tpu_custom_call.1} parent=39 // pred_check
          %p295 = pneg %p83
        $region46: #{tpu_custom_call.1} parent=39 // pred_check_branch
          %297 = sbr.rel (%p295) target = $region48
        $region47: #{tpu_custom_call.1} parent=39 // pred_region
          %298 = dma.done %s291, 32
        $region48: #{tpu_custom_call.1} parent=39 // pred_fallthru
          _
        %s299 = sand.u32 %s24, 1
        %s300 = scalar_lea.sflag [#allocation6], %s299
        %s301 = sand.u32 %s96, 1
        %s302 = smul.addr %s301, 128
        %s303 = scalar_lea.vmem [#allocation7], %s302
        // Predicated region
        $region49: #{tpu_custom_call.1} parent=39 // pred_check
          %p304 = pneg %p109
        $region50: #{tpu_custom_call.1} parent=39 // pred_check_branch
          %306 = sbr.rel (%p304) target = $region52
        $region51: #{tpu_custom_call.1} parent=39 // pred_region
          %307 = dma.done %s300, 2048
        $region52: #{tpu_custom_call.1} parent=39 // pred_fallthru
          _
        // Predicated region
        $region53: #{tpu_custom_call.1} parent=39 // pred_check
          %p308 = pneg %p130
        $region54: #{tpu_custom_call.1} parent=39 // pred_check_branch
          %310 = sbr.rel (%p308) target = $region56
        $region55: #{tpu_custom_call.1} parent=39 // pred_region
          %311 = dma.done [#allocation9], 18432
        $region56: #{tpu_custom_call.1} parent=39 // pred_fallthru
          _
        // Predicated region
        $region57: #{tpu_custom_call.1} parent=39 // pred_check
          %p312 = pneg %p151
        $region58: #{tpu_custom_call.1} parent=39 // pred_check_branch
          %314 = sbr.rel (%p312) target = $region60
        $region59: #{tpu_custom_call.1} parent=39 // pred_region
          %315 = dma.done [#allocation9], 144
        $region60: #{tpu_custom_call.1} parent=39 // pred_fallthru
          _
        %p316 = pneg %p57
        %p317 = pneg %p54
        %s318 = sand.u32 %s24, 1
        %s319 = scalar_lea.sflag [#allocation6], %s318
        %s320 = sand.u32 %s70, 1
        %s321 = smul.addr %s320, 2
        %s322 = scalar_lea.vmem [#allocation5], %s321
        %p323 = pneg %p83
        %p324 = pneg %p80
        %s325 = sand.u32 %s24, 1
        %s326 = scalar_lea.sflag [#allocation6], %s325
        %s327 = sand.u32 %s96, 1
        %s328 = smul.addr %s327, 128
        %s329 = scalar_lea.vmem [#allocation7], %s328
        %p330 = pneg %p109
        %p331 = pneg %p106
        %p332 = pneg %p130
        %p333 = pneg %p127
        %p334 = pneg %p151
        %p335 = pneg %p148
        %p336 = pneg %p179
        %p337 = pneg %p176
        %s338 = sand.u32 %s166, 1
        %s339 = scalar_lea.sflag [#allocation4], %s338
        %s340 = sand.u32 %s166, 1
        %s341 = smul.addr %s340, 64
        %s342 = scalar_lea.vmem [#allocation11], %s341
        %s343 = smul.u32 8, %s29
        %s344 = smul.u32 8, %s29
        %v346 = vld [vmem:[#allocation2] sm:$0xff]
        %v347 = vld [vmem:[#allocation2 + $0x8] sm:$0xff]
        %v348 = vld [vmem:[#allocation2 + $0x10] sm:$0xff]
        %v349 = vld [vmem:[#allocation2 + $0x18] sm:$0xff]
        %v350 = vld [vmem:[#allocation2 + $0x20] sm:$0xff]
        %v351 = vld [vmem:[#allocation2 + $0x28] sm:$0xff]
        %v352 = vld [vmem:[#allocation2 + $0x30] sm:$0xff]
        %v353 = vld [vmem:[#allocation2 + $0x38] sm:$0xff]
        %v354 = vld [vmem:[#allocation2 + $0x40] sm:$0xff]
        %v355 = vld [vmem:[#allocation2 + $0x48] sm:$0xff]
        %v356 = vld [vmem:[#allocation2 + $0x50] sm:$0xff]
        %v357 = vld [vmem:[#allocation2 + $0x58] sm:$0xff]
        %v358 = vld [vmem:[#allocation2 + $0x60] sm:$0xff]
        %v359 = vld [vmem:[#allocation2 + $0x68] sm:$0xff]
        %v360 = vld [vmem:[#allocation2 + $0x70] sm:$0xff]
        %v361 = vld [vmem:[#allocation2 + $0x78] sm:$0xff]
        %v362 = vld [vmem:[%s294] sm:$0x3]
        %v364 = vlaneseq
        %v365 = vshrl.u32 %v364, 7
        %v366 = vsub.s32 0, %v365
        %v367 = vrot.slane %v362, %v366
        %v368 = vlaneseq
        %v369 = vshrl.u32 %v368, 7
        %v370 = vsub.s32 1, %v369
        %v371 = vrot.slane %v362, %v370
        %v374 = vadd.f32 %v346, %v367
        %v375 = vadd.f32 %v347, %v371
        %v376 = vadd.f32 %v348, %v367
        %v377 = vadd.f32 %v349, %v371
        %v378 = vadd.f32 %v350, %v367
        %v379 = vadd.f32 %v351, %v371
        %v380 = vadd.f32 %v352, %v367
        %v381 = vadd.f32 %v353, %v371
        %v382 = vadd.f32 %v354, %v367
        %v383 = vadd.f32 %v355, %v371
        %v384 = vadd.f32 %v356, %v367
        %v385 = vadd.f32 %v357, %v371
        %v386 = vadd.f32 %v358, %v367
        %v387 = vadd.f32 %v359, %v371
        %v388 = vadd.f32 %v360, %v367
        %v389 = vadd.f32 %v361, %v371
        %v390 = vmax.f32 %v374, 0.0
        %v391 = vmax.f32 %v375, 0.0
        %v392 = vmax.f32 %v376, 0.0
        %v393 = vmax.f32 %v377, 0.0
        %v394 = vmax.f32 %v378, 0.0
        %v395 = vmax.f32 %v379, 0.0
        %v396 = vmax.f32 %v380, 0.0
        %v397 = vmax.f32 %v381, 0.0
        %v398 = vmax.f32 %v382, 0.0
        %v399 = vmax.f32 %v383, 0.0
        %v400 = vmax.f32 %v384, 0.0
        %v401 = vmax.f32 %v385, 0.0
        %v402 = vmax.f32 %v386, 0.0
        %v403 = vmax.f32 %v387, 0.0
        %v404 = vmax.f32 %v388, 0.0
        %v405 = vmax.f32 %v389, 0.0
        %v406 = vpack.c.bf16 %v392, %v390
        %v407 = vpack.c.bf16 %v393, %v391
        %v408 = vpack.c.bf16 %v396, %v394
        %v409 = vpack.c.bf16 %v397, %v395
        %v410 = vpack.c.bf16 %v400, %v398
        %v411 = vpack.c.bf16 %v401, %v399
        %v412 = vpack.c.bf16 %v404, %v402
        %v413 = vpack.c.bf16 %v405, %v403
        %v414 = vld [vmem:[#allocation8] sm:$0xff]
        %v415 = vld [vmem:[#allocation8 + $0x24] sm:$0xff]
        %v416 = vld [vmem:[#allocation8 + $0x48] sm:$0xff]
        %v417 = vld [vmem:[#allocation8 + $0x6c] sm:$0xff]
        %v418 = vld [vmem:[#allocation8 + $0x90] sm:$0xff]
        %v419 = vld [vmem:[#allocation8 + $0xb4] sm:$0xff]
        %v420 = vld [vmem:[#allocation8 + $0xd8] sm:$0xff]
        %v421 = vld [vmem:[#allocation8 + $0xfc] sm:$0xff]
        %v422 = vld [vmem:[#allocation8 + $0x120] sm:$0xff]
        %v423 = vld [vmem:[#allocation8 + $0x144] sm:$0xff]
        %v424 = vld [vmem:[#allocation8 + $0x168] sm:$0xff]
        %v425 = vld [vmem:[#allocation8 + $0x18c] sm:$0xff]
        %v426 = vld [vmem:[#allocation8 + $0x1b0] sm:$0xff]
        %v427 = vld [vmem:[#allocation8 + $0x1d4] sm:$0xff]
        %v428 = vld [vmem:[#allocation8 + $0x1f8] sm:$0xff]
        %v429 = vld [vmem:[#allocation8 + $0x21c] sm:$0xff]
        %v430 = vld [vmem:[#allocation8 + $0x240] sm:$0xff]
        %v431 = vld [vmem:[#allocation8 + $0x264] sm:$0xff]
        %v432 = vld [vmem:[#allocation8 + $0x288] sm:$0xff]
        %v433 = vld [vmem:[#allocation8 + $0x2ac] sm:$0xff]
        %v434 = vld [vmem:[#allocation8 + $0x2d0] sm:$0xff]
        %v435 = vld [vmem:[#allocation8 + $0x2f4] sm:$0xff]
        %v436 = vld [vmem:[#allocation8 + $0x318] sm:$0xff]
        %v437 = vld [vmem:[#allocation8 + $0x33c] sm:$0xff]
        %v438 = vld [vmem:[#allocation8 + $0x360] sm:$0xff]
        %v439 = vld [vmem:[#allocation8 + $0x384] sm:$0xff]
        %v440 = vld [vmem:[#allocation8 + $0x3a8] sm:$0xff]
        %v441 = vld [vmem:[#allocation8 + $0x3cc] sm:$0xff]
        %v442 = vld [vmem:[#allocation8 + $0x3f0] sm:$0xff]
        %v443 = vld [vmem:[#allocation8 + $0x414] sm:$0xff]
        %v444 = vld [vmem:[#allocation8 + $0x438] sm:$0xff]
        %v445 = vld [vmem:[#allocation8 + $0x45c] sm:$0xff]
        %v446 = vld [vmem:[#allocation10] sm:$0x3]
        %v448 = vlaneseq
        %v449 = vshrl.u32 %v448, 7
        %v450 = vsub.s32 0, %v449
        %v451 = vrot.slane %v446, %v450
        %v452 = vlaneseq
        %v453 = vshrl.u32 %v452, 7
        %v454 = vsub.s32 1, %v453
        %v455 = vrot.slane %v446, %v454
        %v490 = vunpack.c.l.b16 %v414
        %v491 = vunpack.c.h.b16 %v414
        %v492 = vunpack.c.l.b16 %v415
        %v493 = vunpack.c.h.b16 %v415
        %v494 = vunpack.c.l.b16 %v416
        %v495 = vunpack.c.h.b16 %v416
        %v496 = vunpack.c.l.b16 %v417
        %v497 = vunpack.c.h.b16 %v417
        %v498 = vunpack.c.l.b16 %v418
        %v499 = vunpack.c.h.b16 %v418
        %v500 = vunpack.c.l.b16 %v419
        %v501 = vunpack.c.h.b16 %v419
        %v502 = vunpack.c.l.b16 %v420
        %v503 = vunpack.c.h.b16 %v420
        %v504 = vunpack.c.l.b16 %v421
        %v505 = vunpack.c.h.b16 %v421
        %v506 = vunpack.c.l.b16 %v422
        %v507 = vunpack.c.h.b16 %v422
        %v508 = vunpack.c.l.b16 %v423
        %v509 = vunpack.c.h.b16 %v423
        %v510 = vunpack.c.l.b16 %v424
        %v511 = vunpack.c.h.b16 %v424
        %v512 = vunpack.c.l.b16 %v425
        %v513 = vunpack.c.h.b16 %v425
        %v514 = vunpack.c.l.b16 %v426
        %v515 = vunpack.c.h.b16 %v426
        %v516 = vunpack.c.l.b16 %v427
        %v517 = vunpack.c.h.b16 %v427
        %v518 = vunpack.c.l.b16 %v428
        %v519 = vunpack.c.h.b16 %v428
        %v520 = vunpack.c.l.b16 %v429
        %v521 = vunpack.c.h.b16 %v429
        %v522 = vunpack.c.l.b16 %v430
        %v523 = vunpack.c.h.b16 %v430
        %v524 = vunpack.c.l.b16 %v431
        %v525 = vunpack.c.h.b16 %v431
        %v526 = vunpack.c.l.b16 %v432
        %v527 = vunpack.c.h.b16 %v432
        %v528 = vunpack.c.l.b16 %v433
        %v529 = vunpack.c.h.b16 %v433
        %v530 = vunpack.c.l.b16 %v434
        %v531 = vunpack.c.h.b16 %v434
        %v532 = vunpack.c.l.b16 %v435
        %v533 = vunpack.c.h.b16 %v435
        %v534 = vunpack.c.l.b16 %v436
        %v535 = vunpack.c.h.b16 %v436
        %v536 = vunpack.c.l.b16 %v437
        %v537 = vunpack.c.h.b16 %v437
        %v538 = vunpack.c.l.b16 %v438
        %v539 = vunpack.c.h.b16 %v438
        %v540 = vunpack.c.l.b16 %v439
        %v541 = vunpack.c.h.b16 %v439
        %v542 = vunpack.c.l.b16 %v440
        %v543 = vunpack.c.h.b16 %v440
        %v544 = vunpack.c.l.b16 %v441
        %v545 = vunpack.c.h.b16 %v441
        %v546 = vunpack.c.l.b16 %v442
        %v547 = vunpack.c.h.b16 %v442
        %v548 = vunpack.c.l.b16 %v443
        %v549 = vunpack.c.h.b16 %v443
        %v550 = vunpack.c.l.b16 %v444
        %v551 = vunpack.c.h.b16 %v444
        %v552 = vunpack.c.l.b16 %v445
        %v553 = vunpack.c.h.b16 %v445
        %v554 = vpack.c.b16 %v492, %v490
        %v555 = vpack.c.b16 %v493, %v491
        %v556 = vpack.c.b16 %v496, %v494
        %v557 = vpack.c.b16 %v497, %v495
        %v558 = vpack.c.b16 %v500, %v498
        %v559 = vpack.c.b16 %v501, %v499
        %v560 = vpack.c.b16 %v504, %v502
        %v561 = vpack.c.b16 %v505, %v503
        %v562 = vpack.c.b16 %v508, %v506
        %v563 = vpack.c.b16 %v509, %v507
        %v564 = vpack.c.b16 %v512, %v510
        %v565 = vpack.c.b16 %v513, %v511
        %v566 = vpack.c.b16 %v516, %v514
        %v567 = vpack.c.b16 %v517, %v515
        %v568 = vpack.c.b16 %v520, %v518
        %v569 = vpack.c.b16 %v521, %v519
        %v570 = vpack.c.b16 %v524, %v522
        %v571 = vpack.c.b16 %v525, %v523
        %v572 = vpack.c.b16 %v528, %v526
        %v573 = vpack.c.b16 %v529, %v527
        %v574 = vpack.c.b16 %v532, %v530
        %v575 = vpack.c.b16 %v533, %v531
        %v576 = vpack.c.b16 %v536, %v534
        %v577 = vpack.c.b16 %v537, %v535
        %v578 = vpack.c.b16 %v540, %v538
        %v579 = vpack.c.b16 %v541, %v539
        %v580 = vpack.c.b16 %v544, %v542
        %v581 = vpack.c.b16 %v545, %v543
        %v582 = vpack.c.b16 %v548, %v546
        %v583 = vpack.c.b16 %v549, %v547
        %v584 = vpack.c.b16 %v552, %v550
        %v585 = vpack.c.b16 %v553, %v551
        %618 = vmatprep.subr.bf16.mxu0 %v569
        %619 = vmatpush1.bf16.msra.mxu0 %v568
        %620 = vmatprep.subr.bf16.mxu0 %v567
        %621 = vmatpush1.bf16.msra.mxu0 %v566
        %622 = vmatprep.subr.bf16.mxu0 %v565
        %623 = vmatpush1.bf16.msra.mxu0 %v564
        %624 = vmatprep.subr.bf16.mxu0 %v563
        %625 = vmatpush1.bf16.msra.mxu0 %v562
        %626 = vmatprep.subr.bf16.mxu0 %v561
        %627 = vmatpush1.bf16.msra.mxu0 %v560
        %628 = vmatprep.subr.bf16.mxu0 %v559
        %629 = vmatpush1.bf16.msra.mxu0 %v558
        %630 = vmatprep.subr.bf16.mxu0 %v557
        %631 = vmatpush1.bf16.msra.mxu0 %v556
        %632 = vmatprep.subr.bf16.mxu0 %v555
        %633 = vmatpush1.bf16.msra.mxu0 %v554
        %634 = vmatprep.subr.bf16.mxu0 %v585
        %635 = vmatpush2.bf16.msra.mxu0 %v584
        %636 = vmatprep.subr.bf16.mxu0 %v583
        %637 = vmatpush2.bf16.msra.mxu0 %v582
        %638 = vmatprep.subr.bf16.mxu0 %v581
        %639 = vmatpush2.bf16.msra.mxu0 %v580
        %640 = vmatprep.subr.bf16.mxu0 %v579
        %641 = vmatpush2.bf16.msra.mxu0 %v578
        %642 = vmatprep.subr.bf16.mxu0 %v577
        %643 = vmatpush2.bf16.msra.mxu0 %v576
        %644 = vmatprep.subr.bf16.mxu0 %v575
        %645 = vmatpush2.bf16.msra.mxu0 %v574
        %646 = vmatprep.subr.bf16.mxu0 %v573
        %647 = vmatpush2.bf16.msra.mxu0 %v572
        %648 = vmatprep.subr.bf16.mxu0 %v571
        %649 = vmatpush2.bf16.msra.mxu0 %v570
        %650 = vmatprep.mubr.bf16.mxu0 %v407
        %651 = vmatmul.mubr.bf16.gmra.mxu0 %v406
        %v652 = vpop.f32.mrf.mxu0
        %v653 = vadd.f32 %v451, %v652
        %v654 = vpop.f32.mrf.mxu0
        %v655 = vadd.f32 %v455, %v654
        %v656 = vpop.f32.mrf.mxu0
        %v657 = vadd.f32 %v451, %v656
        %v658 = vpop.f32.mrf.mxu0
        %v659 = vadd.f32 %v455, %v658
        %660 = vmatprep.mubr.bf16.mxu0 %v409
        %661 = vmatmul.mubr.bf16.gmra.mxu0 %v408
        %v662 = vpop.f32.mrf.mxu0
        %v663 = vadd.f32 %v451, %v662
        %v664 = vpop.f32.mrf.mxu0
        %v665 = vadd.f32 %v455, %v664
        %v666 = vpop.f32.mrf.mxu0
        %v667 = vadd.f32 %v451, %v666
        %v668 = vpop.f32.mrf.mxu0
        %v669 = vadd.f32 %v455, %v668
        %670 = vmatprep.mubr.bf16.mxu0 %v411
        %671 = vmatmul.mubr.bf16.gmra.mxu0 %v410
        %v672 = vpop.f32.mrf.mxu0
        %v673 = vadd.f32 %v451, %v672
        %v674 = vpop.f32.mrf.mxu0
        %v675 = vadd.f32 %v455, %v674
        %v676 = vpop.f32.mrf.mxu0
        %v677 = vadd.f32 %v451, %v676
        %v678 = vpop.f32.mrf.mxu0
        %v679 = vadd.f32 %v455, %v678
        %680 = vmatprep.mubr.bf16.mxu0 %v413
        %681 = vmatmul.mubr.bf16.gmra.mxu0 %v412
        %v682 = vpop.f32.mrf.mxu0
        %v683 = vadd.f32 %v451, %v682
        %v684 = vpop.f32.mrf.mxu0
        %v685 = vadd.f32 %v455, %v684
        %v686 = vpop.f32.mrf.mxu0
        %v687 = vadd.f32 %v451, %v686
        %v688 = vpop.f32.mrf.mxu0
        %v689 = vadd.f32 %v455, %v688
        %690 = vdwg.mxu0
        %v691 = vmax.f32 %v653, 0.0
        %v692 = vmax.f32 %v655, 0.0
        %v693 = vmax.f32 %v657, 0.0
        %v694 = vmax.f32 %v659, 0.0
        %v695 = vmax.f32 %v663, 0.0
        %v696 = vmax.f32 %v665, 0.0
        %v697 = vmax.f32 %v667, 0.0
        %v698 = vmax.f32 %v669, 0.0
        %v699 = vmax.f32 %v673, 0.0
        %v700 = vmax.f32 %v675, 0.0
        %v701 = vmax.f32 %v677, 0.0
        %v702 = vmax.f32 %v679, 0.0
        %v703 = vmax.f32 %v683, 0.0
        %v704 = vmax.f32 %v685, 0.0
        %v705 = vmax.f32 %v687, 0.0
        %v706 = vmax.f32 %v689, 0.0
        %v707 = vpack.c.bf16 %v693, %v691
        %v708 = vpack.c.bf16 %v694, %v692
        %v709 = vpack.c.bf16 %v697, %v695
        %v710 = vpack.c.bf16 %v698, %v696
        %v711 = vpack.c.bf16 %v701, %v699
        %v712 = vpack.c.bf16 %v702, %v700
        %v713 = vpack.c.bf16 %v705, %v703
        %v714 = vpack.c.bf16 %v706, %v704
        %v715 = vld [vmem:[#allocation8 + $0x8] sm:$0xff]
        %v716 = vld [vmem:[#allocation8 + $0x2c] sm:$0xff]
        %v717 = vld [vmem:[#allocation8 + $0x50] sm:$0xff]
        %v718 = vld [vmem:[#allocation8 + $0x74] sm:$0xff]
        %v719 = vld [vmem:[#allocation8 + $0x98] sm:$0xff]
        %v720 = vld [vmem:[#allocation8 + $0xbc] sm:$0xff]
        %v721 = vld [vmem:[#allocation8 + $0xe0] sm:$0xff]
        %v722 = vld [vmem:[#allocation8 + $0x104] sm:$0xff]
        %v723 = vld [vmem:[#allocation8 + $0x128] sm:$0xff]
        %v724 = vld [vmem:[#allocation8 + $0x14c] sm:$0xff]
        %v725 = vld [vmem:[#allocation8 + $0x170] sm:$0xff]
        %v726 = vld [vmem:[#allocation8 + $0x194] sm:$0xff]
        %v727 = vld [vmem:[#allocation8 + $0x1b8] sm:$0xff]
        %v728 = vld [vmem:[#allocation8 + $0x1dc] sm:$0xff]
        %v729 = vld [vmem:[#allocation8 + $0x200] sm:$0xff]
        %v730 = vld [vmem:[#allocation8 + $0x224] sm:$0xff]
        %v731 = vld [vmem:[#allocation8 + $0x248] sm:$0xff]
        %v732 = vld [vmem:[#allocation8 + $0x26c] sm:$0xff]
        %v733 = vld [vmem:[#allocation8 + $0x290] sm:$0xff]
        %v734 = vld [vmem:[#allocation8 + $0x2b4] sm:$0xff]
        %v735 = vld [vmem:[#allocation8 + $0x2d8] sm:$0xff]
        %v736 = vld [vmem:[#allocation8 + $0x2fc] sm:$0xff]
        %v737 = vld [vmem:[#allocation8 + $0x320] sm:$0xff]
        %v738 = vld [vmem:[#allocation8 + $0x344] sm:$0xff]
        %v739 = vld [vmem:[#allocation8 + $0x368] sm:$0xff]
        %v740 = vld [vmem:[#allocation8 + $0x38c] sm:$0xff]
        %v741 = vld [vmem:[#allocation8 + $0x3b0] sm:$0xff]
        %v742 = vld [vmem:[#allocation8 + $0x3d4] sm:$0xff]
        %v743 = vld [vmem:[#allocation8 + $0x3f8] sm:$0xff]
        %v744 = vld [vmem:[#allocation8 + $0x41c] sm:$0xff]
        %v745 = vld [vmem:[#allocation8 + $0x440] sm:$0xff]
        %v746 = vld [vmem:[#allocation8 + $0x464] sm:$0xff]
        %v747 = vld [vmem:[#allocation10 + $0x2] sm:$0x3]
        %v749 = vlaneseq
        %v750 = vshrl.u32 %v749, 7
        %v751 = vsub.s32 0, %v750
        %v752 = vrot.slane %v747, %v751
        %v753 = vlaneseq
        %v754 = vshrl.u32 %v753, 7
        %v755 = vsub.s32 1, %v754
        %v756 = vrot.slane %v747, %v755
        %v791 = vunpack.c.l.b16 %v715
        %v792 = vunpack.c.h.b16 %v715
        %v793 = vunpack.c.l.b16 %v716
        %v794 = vunpack.c.h.b16 %v716
        %v795 = vunpack.c.l.b16 %v717
        %v796 = vunpack.c.h.b16 %v717
        %v797 = vunpack.c.l.b16 %v718
        %v798 = vunpack.c.h.b16 %v718
        %v799 = vunpack.c.l.b16 %v719
        %v800 = vunpack.c.h.b16 %v719
        %v801 = vunpack.c.l.b16 %v720
        %v802 = vunpack.c.h.b16 %v720
        %v803 = vunpack.c.l.b16 %v721
        %v804 = vunpack.c.h.b16 %v721
        %v805 = vunpack.c.l.b16 %v722
        %v806 = vunpack.c.h.b16 %v722
        %v807 = vunpack.c.l.b16 %v723
        %v808 = vunpack.c.h.b16 %v723
        %v809 = vunpack.c.l.b16 %v724
        %v810 = vunpack.c.h.b16 %v724
        %v811 = vunpack.c.l.b16 %v725
        %v812 = vunpack.c.h.b16 %v725
        %v813 = vunpack.c.l.b16 %v726
        %v814 = vunpack.c.h.b16 %v726
        %v815 = vunpack.c.l.b16 %v727
        %v816 = vunpack.c.h.b16 %v727
        %v817 = vunpack.c.l.b16 %v728
        %v818 = vunpack.c.h.b16 %v728
        %v819 = vunpack.c.l.b16 %v729
        %v820 = vunpack.c.h.b16 %v729
        %v821 = vunpack.c.l.b16 %v730
        %v822 = vunpack.c.h.b16 %v730
        %v823 = vunpack.c.l.b16 %v731
        %v824 = vunpack.c.h.b16 %v731
        %v825 = vunpack.c.l.b16 %v732
        %v826 = vunpack.c.h.b16 %v732
        %v827 = vunpack.c.l.b16 %v733
        %v828 = vunpack.c.h.b16 %v733
        %v829 = vunpack.c.l.b16 %v734
        %v830 = vunpack.c.h.b16 %v734
        %v831 = vunpack.c.l.b16 %v735
        %v832 = vunpack.c.h.b16 %v735
        %v833 = vunpack.c.l.b16 %v736
        %v834 = vunpack.c.h.b16 %v736
        %v835 = vunpack.c.l.b16 %v737
        %v836 = vunpack.c.h.b16 %v737
        %v837 = vunpack.c.l.b16 %v738
        %v838 = vunpack.c.h.b16 %v738
        %v839 = vunpack.c.l.b16 %v739
        %v840 = vunpack.c.h.b16 %v739
        %v841 = vunpack.c.l.b16 %v740
        %v842 = vunpack.c.h.b16 %v740
        %v843 = vunpack.c.l.b16 %v741
        %v844 = vunpack.c.h.b16 %v741
        %v845 = vunpack.c.l.b16 %v742
        %v846 = vunpack.c.h.b16 %v742
        %v847 = vunpack.c.l.b16 %v743
        %v848 = vunpack.c.h.b16 %v743
        %v849 = vunpack.c.l.b16 %v744
        %v850 = vunpack.c.h.b16 %v744
        %v851 = vunpack.c.l.b16 %v745
        %v852 = vunpack.c.h.b16 %v745
        %v853 = vunpack.c.l.b16 %v746
        %v854 = vunpack.c.h.b16 %v746
        %v855 = vpack.c.b16 %v793, %v791
        %v856 = vpack.c.b16 %v794, %v792
        %v857 = vpack.c.b16 %v797, %v795
        %v858 = vpack.c.b16 %v798, %v796
        %v859 = vpack.c.b16 %v801, %v799
        %v860 = vpack.c.b16 %v802, %v800
        %v861 = vpack.c.b16 %v805, %v803
        %v862 = vpack.c.b16 %v806, %v804
        %v863 = vpack.c.b16 %v809, %v807
        %v864 = vpack.c.b16 %v810, %v808
        %v865 = vpack.c.b16 %v813, %v811
        %v866 = vpack.c.b16 %v814, %v812
        %v867 = vpack.c.b16 %v817, %v815
        %v868 = vpack.c.b16 %v818, %v816
        %v869 = vpack.c.b16 %v821, %v819
        %v870 = vpack.c.b16 %v822, %v820
        %v871 = vpack.c.b16 %v825, %v823
        %v872 = vpack.c.b16 %v826, %v824
        %v873 = vpack.c.b16 %v829, %v827
        %v874 = vpack.c.b16 %v830, %v828
        %v875 = vpack.c.b16 %v833, %v831
        %v876 = vpack.c.b16 %v834, %v832
        %v877 = vpack.c.b16 %v837, %v835
        %v878 = vpack.c.b16 %v838, %v836
        %v879 = vpack.c.b16 %v841, %v839
        %v880 = vpack.c.b16 %v842, %v840
        %v881 = vpack.c.b16 %v845, %v843
        %v882 = vpack.c.b16 %v846, %v844
        %v883 = vpack.c.b16 %v849, %v847
        %v884 = vpack.c.b16 %v850, %v848
        %v885 = vpack.c.b16 %v853, %v851
        %v886 = vpack.c.b16 %v854, %v852
        %919 = vmatprep.subr.bf16.mxu0 %v870
        %920 = vmatpush1.bf16.msra.mxu0 %v869
        %921 = vmatprep.subr.bf16.mxu0 %v868
        %922 = vmatpush1.bf16.msra.mxu0 %v867
        %923 = vmatprep.subr.bf16.mxu0 %v866
        %924 = vmatpush1.bf16.msra.mxu0 %v865
        %925 = vmatprep.subr.bf16.mxu0 %v864
        %926 = vmatpush1.bf16.msra.mxu0 %v863
        %927 = vmatprep.subr.bf16.mxu0 %v862
        %928 = vmatpush1.bf16.msra.mxu0 %v861
        %929 = vmatprep.subr.bf16.mxu0 %v860
        %930 = vmatpush1.bf16.msra.mxu0 %v859
        %931 = vmatprep.subr.bf16.mxu0 %v858
        %932 = vmatpush1.bf16.msra.mxu0 %v857
        %933 = vmatprep.subr.bf16.mxu0 %v856
        %934 = vmatpush1.bf16.msra.mxu0 %v855
        %935 = vmatprep.subr.bf16.mxu0 %v886
        %936 = vmatpush2.bf16.msra.mxu0 %v885
        %937 = vmatprep.subr.bf16.mxu0 %v884
        %938 = vmatpush2.bf16.msra.mxu0 %v883
        %939 = vmatprep.subr.bf16.mxu0 %v882
        %940 = vmatpush2.bf16.msra.mxu0 %v881
        %941 = vmatprep.subr.bf16.mxu0 %v880
        %942 = vmatpush2.bf16.msra.mxu0 %v879
        %943 = vmatprep.subr.bf16.mxu0 %v878
        %944 = vmatpush2.bf16.msra.mxu0 %v877
        %945 = vmatprep.subr.bf16.mxu0 %v876
        %946 = vmatpush2.bf16.msra.mxu0 %v875
        %947 = vmatprep.subr.bf16.mxu0 %v874
        %948 = vmatpush2.bf16.msra.mxu0 %v873
        %949 = vmatprep.subr.bf16.mxu0 %v872
        %950 = vmatpush2.bf16.msra.mxu0 %v871
        %951 = vmatprep.mubr.bf16.mxu0 %v708
        %952 = vmatmul.mubr.bf16.gmra.mxu0 %v707
        %v953 = vpop.f32.mrf.mxu0
        %v954 = vadd.f32 %v752, %v953
        %v955 = vpop.f32.mrf.mxu0
        %v956 = vadd.f32 %v756, %v955
        %v957 = vpop.f32.mrf.mxu0
        %v958 = vadd.f32 %v752, %v957
        %v959 = vpop.f32.mrf.mxu0
        %v960 = vadd.f32 %v756, %v959
        %961 = vmatprep.mubr.bf16.mxu0 %v710
        %962 = vmatmul.mubr.bf16.gmra.mxu0 %v709
        %v963 = vpop.f32.mrf.mxu0
        %v964 = vadd.f32 %v752, %v963
        %v965 = vpop.f32.mrf.mxu0
        %v966 = vadd.f32 %v756, %v965
        %v967 = vpop.f32.mrf.mxu0
        %v968 = vadd.f32 %v752, %v967
        %v969 = vpop.f32.mrf.mxu0
        %v970 = vadd.f32 %v756, %v969
        %971 = vmatprep.mubr.bf16.mxu0 %v712
        %972 = vmatmul.mubr.bf16.gmra.mxu0 %v711
        %v973 = vpop.f32.mrf.mxu0
        %v974 = vadd.f32 %v752, %v973
        %v975 = vpop.f32.mrf.mxu0
        %v976 = vadd.f32 %v756, %v975
        %v977 = vpop.f32.mrf.mxu0
        %v978 = vadd.f32 %v752, %v977
        %v979 = vpop.f32.mrf.mxu0
        %v980 = vadd.f32 %v756, %v979
        %981 = vmatprep.mubr.bf16.mxu0 %v714
        %982 = vmatmul.mubr.bf16.gmra.mxu0 %v713
        %v983 = vpop.f32.mrf.mxu0
        %v984 = vadd.f32 %v752, %v983
        %v985 = vpop.f32.mrf.mxu0
        %v986 = vadd.f32 %v756, %v985
        %v987 = vpop.f32.mrf.mxu0
        %v988 = vadd.f32 %v752, %v987
        %v989 = vpop.f32.mrf.mxu0
        %v990 = vadd.f32 %v756, %v989
        %991 = vdwg.mxu0
        %v992 = vmax.f32 %v954, 0.0
        %v993 = vmax.f32 %v956, 0.0
        %v994 = vmax.f32 %v958, 0.0
        %v995 = vmax.f32 %v960, 0.0
        %v996 = vmax.f32 %v964, 0.0
        %v997 = vmax.f32 %v966, 0.0
        %v998 = vmax.f32 %v968, 0.0
        %v999 = vmax.f32 %v970, 0.0
        %v1000 = vmax.f32 %v974, 0.0
        %v1001 = vmax.f32 %v976, 0.0
        %v1002 = vmax.f32 %v978, 0.0
        %v1003 = vmax.f32 %v980, 0.0
        %v1004 = vmax.f32 %v984, 0.0
        %v1005 = vmax.f32 %v986, 0.0
        %v1006 = vmax.f32 %v988, 0.0
        %v1007 = vmax.f32 %v990, 0.0
        %v1008 = vpack.c.bf16 %v994, %v992
        %v1009 = vpack.c.bf16 %v995, %v993
        %v1010 = vpack.c.bf16 %v998, %v996
        %v1011 = vpack.c.bf16 %v999, %v997
        %v1012 = vpack.c.bf16 %v1002, %v1000
        %v1013 = vpack.c.bf16 %v1003, %v1001
        %v1014 = vpack.c.bf16 %v1006, %v1004
        %v1015 = vpack.c.bf16 %v1007, %v1005
        %v1016 = vld [vmem:[#allocation8 + $0x10] sm:$0xff]
        %v1017 = vld [vmem:[#allocation8 + $0x34] sm:$0xff]
        %v1018 = vld [vmem:[#allocation8 + $0x58] sm:$0xff]
        %v1019 = vld [vmem:[#allocation8 + $0x7c] sm:$0xff]
        %v1020 = vld [vmem:[#allocation8 + $0xa0] sm:$0xff]
        %v1021 = vld [vmem:[#allocation8 + $0xc4] sm:$0xff]
        %v1022 = vld [vmem:[#allocation8 + $0xe8] sm:$0xff]
        %v1023 = vld [vmem:[#allocation8 + $0x10c] sm:$0xff]
        %v1024 = vld [vmem:[#allocation8 + $0x130] sm:$0xff]
        %v1025 = vld [vmem:[#allocation8 + $0x154] sm:$0xff]
        %v1026 = vld [vmem:[#allocation8 + $0x178] sm:$0xff]
        %v1027 = vld [vmem:[#allocation8 + $0x19c] sm:$0xff]
        %v1028 = vld [vmem:[#allocation8 + $0x1c0] sm:$0xff]
        %v1029 = vld [vmem:[#allocation8 + $0x1e4] sm:$0xff]
        %v1030 = vld [vmem:[#allocation8 + $0x208] sm:$0xff]
        %v1031 = vld [vmem:[#allocation8 + $0x22c] sm:$0xff]
        %v1032 = vld [vmem:[#allocation8 + $0x250] sm:$0xff]
        %v1033 = vld [vmem:[#allocation8 + $0x274] sm:$0xff]
        %v1034 = vld [vmem:[#allocation8 + $0x298] sm:$0xff]
        %v1035 = vld [vmem:[#allocation8 + $0x2bc] sm:$0xff]
        %v1036 = vld [vmem:[#allocation8 + $0x2e0] sm:$0xff]
        %v1037 = vld [vmem:[#allocation8 + $0x304] sm:$0xff]
        %v1038 = vld [vmem:[#allocation8 + $0x328] sm:$0xff]
        %v1039 = vld [vmem:[#allocation8 + $0x34c] sm:$0xff]
        %v1040 = vld [vmem:[#allocation8 + $0x370] sm:$0xff]
        %v1041 = vld [vmem:[#allocation8 + $0x394] sm:$0xff]
        %v1042 = vld [vmem:[#allocation8 + $0x3b8] sm:$0xff]
        %v1043 = vld [vmem:[#allocation8 + $0x3dc] sm:$0xff]
        %v1044 = vld [vmem:[#allocation8 + $0x400] sm:$0xff]
        %v1045 = vld [vmem:[#allocation8 + $0x424] sm:$0xff]
        %v1046 = vld [vmem:[#allocation8 + $0x448] sm:$0xff]
        %v1047 = vld [vmem:[#allocation8 + $0x46c] sm:$0xff]
        %v1048 = vld [vmem:[#allocation10 + $0x4] sm:$0x3]
        %v1050 = vlaneseq
        %v1051 = vshrl.u32 %v1050, 7
        %v1052 = vsub.s32 0, %v1051
        %v1053 = vrot.slane %v1048, %v1052
        %v1054 = vlaneseq
        %v1055 = vshrl.u32 %v1054, 7
        %v1056 = vsub.s32 1, %v1055
        %v1057 = vrot.slane %v1048, %v1056
        %v1092 = vunpack.c.l.b16 %v1016
        %v1093 = vunpack.c.h.b16 %v1016
        %v1094 = vunpack.c.l.b16 %v1017
        %v1095 = vunpack.c.h.b16 %v1017
        %v1096 = vunpack.c.l.b16 %v1018
        %v1097 = vunpack.c.h.b16 %v1018
        %v1098 = vunpack.c.l.b16 %v1019
        %v1099 = vunpack.c.h.b16 %v1019
        %v1100 = vunpack.c.l.b16 %v1020
        %v1101 = vunpack.c.h.b16 %v1020
        %v1102 = vunpack.c.l.b16 %v1021
        %v1103 = vunpack.c.h.b16 %v1021
        %v1104 = vunpack.c.l.b16 %v1022
        %v1105 = vunpack.c.h.b16 %v1022
        %v1106 = vunpack.c.l.b16 %v1023
        %v1107 = vunpack.c.h.b16 %v1023
        %v1108 = vunpack.c.l.b16 %v1024
        %v1109 = vunpack.c.h.b16 %v1024
        %v1110 = vunpack.c.l.b16 %v1025
        %v1111 = vunpack.c.h.b16 %v1025
        %v1112 = vunpack.c.l.b16 %v1026
        %v1113 = vunpack.c.h.b16 %v1026
        %v1114 = vunpack.c.l.b16 %v1027
        %v1115 = vunpack.c.h.b16 %v1027
        %v1116 = vunpack.c.l.b16 %v1028
        %v1117 = vunpack.c.h.b16 %v1028
        %v1118 = vunpack.c.l.b16 %v1029
        %v1119 = vunpack.c.h.b16 %v1029
        %v1120 = vunpack.c.l.b16 %v1030
        %v1121 = vunpack.c.h.b16 %v1030
        %v1122 = vunpack.c.l.b16 %v1031
        %v1123 = vunpack.c.h.b16 %v1031
        %v1124 = vunpack.c.l.b16 %v1032
        %v1125 = vunpack.c.h.b16 %v1032
        %v1126 = vunpack.c.l.b16 %v1033
        %v1127 = vunpack.c.h.b16 %v1033
        %v1128 = vunpack.c.l.b16 %v1034
        %v1129 = vunpack.c.h.b16 %v1034
        %v1130 = vunpack.c.l.b16 %v1035
        %v1131 = vunpack.c.h.b16 %v1035
        %v1132 = vunpack.c.l.b16 %v1036
        %v1133 = vunpack.c.h.b16 %v1036
        %v1134 = vunpack.c.l.b16 %v1037
        %v1135 = vunpack.c.h.b16 %v1037
        %v1136 = vunpack.c.l.b16 %v1038
        %v1137 = vunpack.c.h.b16 %v1038
        %v1138 = vunpack.c.l.b16 %v1039
        %v1139 = vunpack.c.h.b16 %v1039
        %v1140 = vunpack.c.l.b16 %v1040
        %v1141 = vunpack.c.h.b16 %v1040
        %v1142 = vunpack.c.l.b16 %v1041
        %v1143 = vunpack.c.h.b16 %v1041
        %v1144 = vunpack.c.l.b16 %v1042
        %v1145 = vunpack.c.h.b16 %v1042
        %v1146 = vunpack.c.l.b16 %v1043
        %v1147 = vunpack.c.h.b16 %v1043
        %v1148 = vunpack.c.l.b16 %v1044
        %v1149 = vunpack.c.h.b16 %v1044
        %v1150 = vunpack.c.l.b16 %v1045
        %v1151 = vunpack.c.h.b16 %v1045
        %v1152 = vunpack.c.l.b16 %v1046
        %v1153 = vunpack.c.h.b16 %v1046
        %v1154 = vunpack.c.l.b16 %v1047
        %v1155 = vunpack.c.h.b16 %v1047
        %v1156 = vpack.c.b16 %v1094, %v1092
        %v1157 = vpack.c.b16 %v1095, %v1093
        %v1158 = vpack.c.b16 %v1098, %v1096
        %v1159 = vpack.c.b16 %v1099, %v1097
        %v1160 = vpack.c.b16 %v1102, %v1100
        %v1161 = vpack.c.b16 %v1103, %v1101
        %v1162 = vpack.c.b16 %v1106, %v1104
        %v1163 = vpack.c.b16 %v1107, %v1105
        %v1164 = vpack.c.b16 %v1110, %v1108
        %v1165 = vpack.c.b16 %v1111, %v1109
        %v1166 = vpack.c.b16 %v1114, %v1112
        %v1167 = vpack.c.b16 %v1115, %v1113
        %v1168 = vpack.c.b16 %v1118, %v1116
        %v1169 = vpack.c.b16 %v1119, %v1117
        %v1170 = vpack.c.b16 %v1122, %v1120
        %v1171 = vpack.c.b16 %v1123, %v1121
        %v1172 = vpack.c.b16 %v1126, %v1124
        %v1173 = vpack.c.b16 %v1127, %v1125
        %v1174 = vpack.c.b16 %v1130, %v1128
        %v1175 = vpack.c.b16 %v1131, %v1129
        %v1176 = vpack.c.b16 %v1134, %v1132
        %v1177 = vpack.c.b16 %v1135, %v1133
        %v1178 = vpack.c.b16 %v1138, %v1136
        %v1179 = vpack.c.b16 %v1139, %v1137
        %v1180 = vpack.c.b16 %v1142, %v1140
        %v1181 = vpack.c.b16 %v1143, %v1141
        %v1182 = vpack.c.b16 %v1146, %v1144
        %v1183 = vpack.c.b16 %v1147, %v1145
        %v1184 = vpack.c.b16 %v1150, %v1148
        %v1185 = vpack.c.b16 %v1151, %v1149
        %v1186 = vpack.c.b16 %v1154, %v1152
        %v1187 = vpack.c.b16 %v1155, %v1153
        %1220 = vmatprep.subr.bf16.mxu0 %v1171
        %1221 = vmatpush1.bf16.msra.mxu0 %v1170
        %1222 = vmatprep.subr.bf16.mxu0 %v1169
        %1223 = vmatpush1.bf16.msra.mxu0 %v1168
        %1224 = vmatprep.subr.bf16.mxu0 %v1167
        %1225 = vmatpush1.bf16.msra.mxu0 %v1166
        %1226 = vmatprep.subr.bf16.mxu0 %v1165
        %1227 = vmatpush1.bf16.msra.mxu0 %v1164
        %1228 = vmatprep.subr.bf16.mxu0 %v1163
        %1229 = vmatpush1.bf16.msra.mxu0 %v1162
        %1230 = vmatprep.subr.bf16.mxu0 %v1161
        %1231 = vmatpush1.bf16.msra.mxu0 %v1160
        %1232 = vmatprep.subr.bf16.mxu0 %v1159
        %1233 = vmatpush1.bf16.msra.mxu0 %v1158
        %1234 = vmatprep.subr.bf16.mxu0 %v1157
        %1235 = vmatpush1.bf16.msra.mxu0 %v1156
        %1236 = vmatprep.subr.bf16.mxu0 %v1187
        %1237 = vmatpush2.bf16.msra.mxu0 %v1186
        %1238 = vmatprep.subr.bf16.mxu0 %v1185
        %1239 = vmatpush2.bf16.msra.mxu0 %v1184
        %1240 = vmatprep.subr.bf16.mxu0 %v1183
        %1241 = vmatpush2.bf16.msra.mxu0 %v1182
        %1242 = vmatprep.subr.bf16.mxu0 %v1181
        %1243 = vmatpush2.bf16.msra.mxu0 %v1180
        %1244 = vmatprep.subr.bf16.mxu0 %v1179
        %1245 = vmatpush2.bf16.msra.mxu0 %v1178
        %1246 = vmatprep.subr.bf16.mxu0 %v1177
        %1247 = vmatpush2.bf16.msra.mxu0 %v1176
        %1248 = vmatprep.subr.bf16.mxu0 %v1175
        %1249 = vmatpush2.bf16.msra.mxu0 %v1174
        %1250 = vmatprep.subr.bf16.mxu0 %v1173
        %1251 = vmatpush2.bf16.msra.mxu0 %v1172
        %1252 = vmatprep.mubr.bf16.mxu0 %v1009
        %1253 = vmatmul.mubr.bf16.gmra.mxu0 %v1008
        %v1254 = vpop.f32.mrf.mxu0
        %v1255 = vadd.f32 %v1053, %v1254
        %v1256 = vpop.f32.mrf.mxu0
        %v1257 = vadd.f32 %v1057, %v1256
        %v1258 = vpop.f32.mrf.mxu0
        %v1259 = vadd.f32 %v1053, %v1258
        %v1260 = vpop.f32.mrf.mxu0
        %v1261 = vadd.f32 %v1057, %v1260
        %1262 = vmatprep.mubr.bf16.mxu0 %v1011
        %1263 = vmatmul.mubr.bf16.gmra.mxu0 %v1010
        %v1264 = vpop.f32.mrf.mxu0
        %v1265 = vadd.f32 %v1053, %v1264
        %v1266 = vpop.f32.mrf.mxu0
        %v1267 = vadd.f32 %v1057, %v1266
        %v1268 = vpop.f32.mrf.mxu0
        %v1269 = vadd.f32 %v1053, %v1268
        %v1270 = vpop.f32.mrf.mxu0
        %v1271 = vadd.f32 %v1057, %v1270
        %1272 = vmatprep.mubr.bf16.mxu0 %v1013
        %1273 = vmatmul.mubr.bf16.gmra.mxu0 %v1012
        %v1274 = vpop.f32.mrf.mxu0
        %v1275 = vadd.f32 %v1053, %v1274
        %v1276 = vpop.f32.mrf.mxu0
        %v1277 = vadd.f32 %v1057, %v1276
        %v1278 = vpop.f32.mrf.mxu0
        %v1279 = vadd.f32 %v1053, %v1278
        %v1280 = vpop.f32.mrf.mxu0
        %v1281 = vadd.f32 %v1057, %v1280
        %1282 = vmatprep.mubr.bf16.mxu0 %v1015
        %1283 = vmatmul.mubr.bf16.gmra.mxu0 %v1014
        %v1284 = vpop.f32.mrf.mxu0
        %v1285 = vadd.f32 %v1053, %v1284
        %v1286 = vpop.f32.mrf.mxu0
        %v1287 = vadd.f32 %v1057, %v1286
        %v1288 = vpop.f32.mrf.mxu0
        %v1289 = vadd.f32 %v1053, %v1288
        %v1290 = vpop.f32.mrf.mxu0
        %v1291 = vadd.f32 %v1057, %v1290
        %1292 = vdwg.mxu0
        %v1293 = vmax.f32 %v1255, 0.0
        %v1294 = vmax.f32 %v1257, 0.0
        %v1295 = vmax.f32 %v1259, 0.0
        %v1296 = vmax.f32 %v1261, 0.0
        %v1297 = vmax.f32 %v1265, 0.0
        %v1298 = vmax.f32 %v1267, 0.0
        %v1299 = vmax.f32 %v1269, 0.0
        %v1300 = vmax.f32 %v1271, 0.0
        %v1301 = vmax.f32 %v1275, 0.0
        %v1302 = vmax.f32 %v1277, 0.0
        %v1303 = vmax.f32 %v1279, 0.0
        %v1304 = vmax.f32 %v1281, 0.0
        %v1305 = vmax.f32 %v1285, 0.0
        %v1306 = vmax.f32 %v1287, 0.0
        %v1307 = vmax.f32 %v1289, 0.0
        %v1308 = vmax.f32 %v1291, 0.0
        %v1309 = vpack.c.bf16 %v1295, %v1293
        %v1310 = vpack.c.bf16 %v1296, %v1294
        %v1311 = vpack.c.bf16 %v1299, %v1297
        %v1312 = vpack.c.bf16 %v1300, %v1298
        %v1313 = vpack.c.bf16 %v1303, %v1301
        %v1314 = vpack.c.bf16 %v1304, %v1302
        %v1315 = vpack.c.bf16 %v1307, %v1305
        %v1316 = vpack.c.bf16 %v1308, %v1306
        %v1317 = vld [vmem:[#allocation8 + $0x18] sm:$0xff]
        %v1318 = vld [vmem:[#allocation8 + $0x20] sm:$0xf]
        %v1319 = vld [vmem:[#allocation8 + $0x3c] sm:$0xff]
        %v1320 = vld [vmem:[#allocation8 + $0x44] sm:$0xf]
        %v1321 = vld [vmem:[#allocation8 + $0x60] sm:$0xff]
        %v1322 = vld [vmem:[#allocation8 + $0x68] sm:$0xf]
        %v1323 = vld [vmem:[#allocation8 + $0x84] sm:$0xff]
        %v1324 = vld [vmem:[#allocation8 + $0x8c] sm:$0xf]
        %v1325 = vld [vmem:[#allocation8 + $0xa8] sm:$0xff]
        %v1326 = vld [vmem:[#allocation8 + $0xb0] sm:$0xf]
        %v1327 = vld [vmem:[#allocation8 + $0xcc] sm:$0xff]
        %v1328 = vld [vmem:[#allocation8 + $0xd4] sm:$0xf]
        %v1329 = vld [vmem:[#allocation8 + $0xf0] sm:$0xff]
        %v1330 = vld [vmem:[#allocation8 + $0xf8] sm:$0xf]
        %v1331 = vld [vmem:[#allocation8 + $0x114] sm:$0xff]
        %v1332 = vld [vmem:[#allocation8 + $0x11c] sm:$0xf]
        %v1333 = vld [vmem:[#allocation8 + $0x138] sm:$0xff]
        %v1334 = vld [vmem:[#allocation8 + $0x140] sm:$0xf]
        %v1335 = vld [vmem:[#allocation8 + $0x15c] sm:$0xff]
        %v1336 = vld [vmem:[#allocation8 + $0x164] sm:$0xf]
        %v1337 = vld [vmem:[#allocation8 + $0x180] sm:$0xff]
        %v1338 = vld [vmem:[#allocation8 + $0x188] sm:$0xf]
        %v1339 = vld [vmem:[#allocation8 + $0x1a4] sm:$0xff]
        %v1340 = vld [vmem:[#allocation8 + $0x1ac] sm:$0xf]
        %v1341 = vld [vmem:[#allocation8 + $0x1c8] sm:$0xff]
        %v1342 = vld [vmem:[#allocation8 + $0x1d0] sm:$0xf]
        %v1343 = vld [vmem:[#allocation8 + $0x1ec] sm:$0xff]
        %v1344 = vld [vmem:[#allocation8 + $0x1f4] sm:$0xf]
        %v1345 = vld [vmem:[#allocation8 + $0x210] sm:$0xff]
        %v1346 = vld [vmem:[#allocation8 + $0x218] sm:$0xf]
        %v1347 = vld [vmem:[#allocation8 + $0x234] sm:$0xff]
        %v1348 = vld [vmem:[#allocation8 + $0x23c] sm:$0xf]
        %v1349 = vld [vmem:[#allocation8 + $0x258] sm:$0xff]
        %v1350 = vld [vmem:[#allocation8 + $0x260] sm:$0xf]
        %v1351 = vld [vmem:[#allocation8 + $0x27c] sm:$0xff]
        %v1352 = vld [vmem:[#allocation8 + $0x284] sm:$0xf]
        %v1353 = vld [vmem:[#allocation8 + $0x2a0] sm:$0xff]
        %v1354 = vld [vmem:[#allocation8 + $0x2a8] sm:$0xf]
        %v1355 = vld [vmem:[#allocation8 + $0x2c4] sm:$0xff]
        %v1356 = vld [vmem:[#allocation8 + $0x2cc] sm:$0xf]
        %v1357 = vld [vmem:[#allocation8 + $0x2e8] sm:$0xff]
        %v1358 = vld [vmem:[#allocation8 + $0x2f0] sm:$0xf]
        %v1359 = vld [vmem:[#allocation8 + $0x30c] sm:$0xff]
        %v1360 = vld [vmem:[#allocation8 + $0x314] sm:$0xf]
        %v1361 = vld [vmem:[#allocation8 + $0x330] sm:$0xff]
        %v1362 = vld [vmem:[#allocation8 + $0x338] sm:$0xf]
        %v1363 = vld [vmem:[#allocation8 + $0x354] sm:$0xff]
        %v1364 = vld [vmem:[#allocation8 + $0x35c] sm:$0xf]
        %v1365 = vld [vmem:[#allocation8 + $0x378] sm:$0xff]
        %v1366 = vld [vmem:[#allocation8 + $0x380] sm:$0xf]
        %v1367 = vld [vmem:[#allocation8 + $0x39c] sm:$0xff]
        %v1368 = vld [vmem:[#allocation8 + $0x3a4] sm:$0xf]
        %v1369 = vld [vmem:[#allocation8 + $0x3c0] sm:$0xff]
        %v1370 = vld [vmem:[#allocation8 + $0x3c8] sm:$0xf]
        %v1371 = vld [vmem:[#allocation8 + $0x3e4] sm:$0xff]
        %v1372 = vld [vmem:[#allocation8 + $0x3ec] sm:$0xf]
        %v1373 = vld [vmem:[#allocation8 + $0x408] sm:$0xff]
        %v1374 = vld [vmem:[#allocation8 + $0x410] sm:$0xf]
        %v1375 = vld [vmem:[#allocation8 + $0x42c] sm:$0xff]
        %v1376 = vld [vmem:[#allocation8 + $0x434] sm:$0xf]
        %v1377 = vld [vmem:[#allocation8 + $0x450] sm:$0xff]
        %v1378 = vld [vmem:[#allocation8 + $0x458] sm:$0xf]
        %v1379 = vld [vmem:[#allocation8 + $0x474] sm:$0xff]
        %v1380 = vld [vmem:[#allocation8 + $0x47c] sm:$0xf]
        %v1381 = vld [vmem:[#allocation10 + $0x6] sm:$0x7]
        %v1383 = vlaneseq
        %v1384 = vshrl.u32 %v1383, 7
        %v1385 = vsub.s32 0, %v1384
        %v1386 = vrot.slane %v1381, %v1385
        %v1387 = vlaneseq
        %v1388 = vshrl.u32 %v1387, 7
        %v1389 = vsub.s32 1, %v1388
        %v1390 = vrot.slane %v1381, %v1389
        %v1391 = vlaneseq
        %v1392 = vshrl.u32 %v1391, 7
        %v1393 = vsub.s32 2, %v1392
        %v1394 = vrot.slane %v1381, %v1393
        %v1462 = vunpack.c.l.b16 %v1317
        %v1463 = vunpack.c.h.b16 %v1317
        %v1464 = vunpack.c.l.b16 %v1318
        %v1465 = vunpack.c.l.b16 %v1319
        %v1466 = vunpack.c.h.b16 %v1319
        %v1467 = vunpack.c.l.b16 %v1320
        %v1468 = vunpack.c.l.b16 %v1321
        %v1469 = vunpack.c.h.b16 %v1321
        %v1470 = vunpack.c.l.b16 %v1322
        %v1471 = vunpack.c.l.b16 %v1323
        %v1472 = vunpack.c.h.b16 %v1323
        %v1473 = vunpack.c.l.b16 %v1324
        %v1474 = vunpack.c.l.b16 %v1325
        %v1475 = vunpack.c.h.b16 %v1325
        %v1476 = vunpack.c.l.b16 %v1326
        %v1477 = vunpack.c.l.b16 %v1327
        %v1478 = vunpack.c.h.b16 %v1327
        %v1479 = vunpack.c.l.b16 %v1328
        %v1480 = vunpack.c.l.b16 %v1329
        %v1481 = vunpack.c.h.b16 %v1329
        %v1482 = vunpack.c.l.b16 %v1330
        %v1483 = vunpack.c.l.b16 %v1331
        %v1484 = vunpack.c.h.b16 %v1331
        %v1485 = vunpack.c.l.b16 %v1332
        %v1486 = vunpack.c.l.b16 %v1333
        %v1487 = vunpack.c.h.b16 %v1333
        %v1488 = vunpack.c.l.b16 %v1334
        %v1489 = vunpack.c.l.b16 %v1335
        %v1490 = vunpack.c.h.b16 %v1335
        %v1491 = vunpack.c.l.b16 %v1336
        %v1492 = vunpack.c.l.b16 %v1337
        %v1493 = vunpack.c.h.b16 %v1337
        %v1494 = vunpack.c.l.b16 %v1338
        %v1495 = vunpack.c.l.b16 %v1339
        %v1496 = vunpack.c.h.b16 %v1339
        %v1497 = vunpack.c.l.b16 %v1340
        %v1498 = vunpack.c.l.b16 %v1341
        %v1499 = vunpack.c.h.b16 %v1341
        %v1500 = vunpack.c.l.b16 %v1342
        %v1501 = vunpack.c.l.b16 %v1343
        %v1502 = vunpack.c.h.b16 %v1343
        %v1503 = vunpack.c.l.b16 %v1344
        %v1504 = vunpack.c.l.b16 %v1345
        %v1505 = vunpack.c.h.b16 %v1345
        %v1506 = vunpack.c.l.b16 %v1346
        %v1507 = vunpack.c.l.b16 %v1347
        %v1508 = vunpack.c.h.b16 %v1347
        %v1509 = vunpack.c.l.b16 %v1348
        %v1510 = vunpack.c.l.b16 %v1349
        %v1511 = vunpack.c.h.b16 %v1349
        %v1512 = vunpack.c.l.b16 %v1350
        %v1513 = vunpack.c.l.b16 %v1351
        %v1514 = vunpack.c.h.b16 %v1351
        %v1515 = vunpack.c.l.b16 %v1352
        %v1516 = vunpack.c.l.b16 %v1353
        %v1517 = vunpack.c.h.b16 %v1353
        %v1518 = vunpack.c.l.b16 %v1354
        %v1519 = vunpack.c.l.b16 %v1355
        %v1520 = vunpack.c.h.b16 %v1355
        %v1521 = vunpack.c.l.b16 %v1356
        %v1522 = vunpack.c.l.b16 %v1357
        %v1523 = vunpack.c.h.b16 %v1357
        %v1524 = vunpack.c.l.b16 %v1358
        %v1525 = vunpack.c.l.b16 %v1359
        %v1526 = vunpack.c.h.b16 %v1359
        %v1527 = vunpack.c.l.b16 %v1360
        %v1528 = vunpack.c.l.b16 %v1361
        %v1529 = vunpack.c.h.b16 %v1361
        %v1530 = vunpack.c.l.b16 %v1362
        %v1531 = vunpack.c.l.b16 %v1363
        %v1532 = vunpack.c.h.b16 %v1363
        %v1533 = vunpack.c.l.b16 %v1364
        %v1534 = vunpack.c.l.b16 %v1365
        %v1535 = vunpack.c.h.b16 %v1365
        %v1536 = vunpack.c.l.b16 %v1366
        %v1537 = vunpack.c.l.b16 %v1367
        %v1538 = vunpack.c.h.b16 %v1367
        %v1539 = vunpack.c.l.b16 %v1368
        %v1540 = vunpack.c.l.b16 %v1369
        %v1541 = vunpack.c.h.b16 %v1369
        %v1542 = vunpack.c.l.b16 %v1370
        %v1543 = vunpack.c.l.b16 %v1371
        %v1544 = vunpack.c.h.b16 %v1371
        %v1545 = vunpack.c.l.b16 %v1372
        %v1546 = vunpack.c.l.b16 %v1373
        %v1547 = vunpack.c.h.b16 %v1373
        %v1548 = vunpack.c.l.b16 %v1374
        %v1549 = vunpack.c.l.b16 %v1375
        %v1550 = vunpack.c.h.b16 %v1375
        %v1551 = vunpack.c.l.b16 %v1376
        %v1552 = vunpack.c.l.b16 %v1377
        %v1553 = vunpack.c.h.b16 %v1377
        %v1554 = vunpack.c.l.b16 %v1378
        %v1555 = vunpack.c.l.b16 %v1379
        %v1556 = vunpack.c.h.b16 %v1379
        %v1557 = vunpack.c.l.b16 %v1380
        %v1558 = vpack.c.b16 %v1465, %v1462
        %v1559 = vpack.c.b16 %v1466, %v1463
        %v1560 = vpack.c.b16 %v1467, %v1464
        %v1561 = vpack.c.b16 %v1471, %v1468
        %v1562 = vpack.c.b16 %v1472, %v1469
        %v1563 = vpack.c.b16 %v1473, %v1470
        %v1564 = vpack.c.b16 %v1477, %v1474
        %v1565 = vpack.c.b16 %v1478, %v1475
        %v1566 = vpack.c.b16 %v1479, %v1476
        %v1567 = vpack.c.b16 %v1483, %v1480
        %v1568 = vpack.c.b16 %v1484, %v1481
        %v1569 = vpack.c.b16 %v1485, %v1482
        %v1570 = vpack.c.b16 %v1489, %v1486
        %v1571 = vpack.c.b16 %v1490, %v1487
        %v1572 = vpack.c.b16 %v1491, %v1488
        %v1573 = vpack.c.b16 %v1495, %v1492
        %v1574 = vpack.c.b16 %v1496, %v1493
        %v1575 = vpack.c.b16 %v1497, %v1494
        %v1576 = vpack.c.b16 %v1501, %v1498
        %v1577 = vpack.c.b16 %v1502, %v1499
        %v1578 = vpack.c.b16 %v1503, %v1500
        %v1579 = vpack.c.b16 %v1507, %v1504
        %v1580 = vpack.c.b16 %v1508, %v1505
        %v1581 = vpack.c.b16 %v1509, %v1506
        %v1582 = vpack.c.b16 %v1513, %v1510
        %v1583 = vpack.c.b16 %v1514, %v1511
        %v1584 = vpack.c.b16 %v1515, %v1512
        %v1585 = vpack.c.b16 %v1519, %v1516
        %v1586 = vpack.c.b16 %v1520, %v1517
        %v1587 = vpack.c.b16 %v1521, %v1518
        %v1588 = vpack.c.b16 %v1525, %v1522
        %v1589 = vpack.c.b16 %v1526, %v1523
        %v1590 = vpack.c.b16 %v1527, %v1524
        %v1591 = vpack.c.b16 %v1531, %v1528
        %v1592 = vpack.c.b16 %v1532, %v1529
        %v1593 = vpack.c.b16 %v1533, %v1530
        %v1594 = vpack.c.b16 %v1537, %v1534
        %v1595 = vpack.c.b16 %v1538, %v1535
        %v1596 = vpack.c.b16 %v1539, %v1536
        %v1597 = vpack.c.b16 %v1543, %v1540
        %v1598 = vpack.c.b16 %v1544, %v1541
        %v1599 = vpack.c.b16 %v1545, %v1542
        %v1600 = vpack.c.b16 %v1549, %v1546
        %v1601 = vpack.c.b16 %v1550, %v1547
        %v1602 = vpack.c.b16 %v1551, %v1548
        %v1603 = vpack.c.b16 %v1555, %v1552
        %v1604 = vpack.c.b16 %v1556, %v1553
        %v1605 = vpack.c.b16 %v1557, %v1554
        %1654 = vmatprep.subr.bf16.mxu0 %v1580
        %1655 = vmatpush1.bf16.msra.mxu0 %v1579
        %1656 = vmatprep.subr.bf16.mxu0 %v1577
        %1657 = vmatpush1.bf16.msra.mxu0 %v1576
        %1658 = vmatprep.subr.bf16.mxu0 %v1574
        %1659 = vmatpush1.bf16.msra.mxu0 %v1573
        %1660 = vmatprep.subr.bf16.mxu0 %v1571
        %1661 = vmatpush1.bf16.msra.mxu0 %v1570
        %1662 = vmatprep.subr.bf16.mxu0 %v1568
        %1663 = vmatpush1.bf16.msra.mxu0 %v1567
        %1664 = vmatprep.subr.bf16.mxu0 %v1565
        %1665 = vmatpush1.bf16.msra.mxu0 %v1564
        %1666 = vmatprep.subr.bf16.mxu0 %v1562
        %1667 = vmatpush1.bf16.msra.mxu0 %v1561
        %1668 = vmatprep.subr.bf16.mxu0 %v1559
        %1669 = vmatpush1.bf16.msra.mxu0 %v1558
        %1670 = vmatprep.subr.bf16.mxu0 %v1604
        %1671 = vmatpush2.bf16.msra.mxu0 %v1603
        %1672 = vmatprep.subr.bf16.mxu0 %v1601
        %1673 = vmatpush2.bf16.msra.mxu0 %v1600
        %1674 = vmatprep.subr.bf16.mxu0 %v1598
        %1675 = vmatpush2.bf16.msra.mxu0 %v1597
        %1676 = vmatprep.subr.bf16.mxu0 %v1595
        %1677 = vmatpush2.bf16.msra.mxu0 %v1594
        %1678 = vmatprep.subr.bf16.mxu0 %v1592
        %1679 = vmatpush2.bf16.msra.mxu0 %v1591
        %1680 = vmatprep.subr.bf16.mxu0 %v1589
        %1681 = vmatpush2.bf16.msra.mxu0 %v1588
        %1682 = vmatprep.subr.bf16.mxu0 %v1586
        %1683 = vmatpush2.bf16.msra.mxu0 %v1585
        %1684 = vmatprep.subr.bf16.mxu0 %v1583
        %1685 = vmatpush2.bf16.msra.mxu0 %v1582
        %1686 = vmatprep.mubr.bf16.mxu0 %v1310
        %1687 = vmatmul.mubr.bf16.gmra.mxu0 %v1309
        %v1688 = vpop.f32.mrf.mxu0
        %v1689 = vadd.f32 %v1386, %v1688
        %v1690 = vpop.f32.mrf.mxu0
        %v1691 = vadd.f32 %v1390, %v1690
        %v1692 = vpop.f32.mrf.mxu0
        %v1693 = vadd.f32 %v1386, %v1692
        %v1694 = vpop.f32.mrf.mxu0
        %v1695 = vadd.f32 %v1390, %v1694
        %1696 = vmatprep.mubr.bf16.mxu0 %v1312
        %1697 = vmatmul.mubr.bf16.gmra.mxu0 %v1311
        %v1698 = vpop.f32.mrf.mxu0
        %v1699 = vadd.f32 %v1386, %v1698
        %v1700 = vpop.f32.mrf.mxu0
        %v1701 = vadd.f32 %v1390, %v1700
        %v1702 = vpop.f32.mrf.mxu0
        %v1703 = vadd.f32 %v1386, %v1702
        %v1704 = vpop.f32.mrf.mxu0
        %v1705 = vadd.f32 %v1390, %v1704
        %1706 = vmatprep.mubr.bf16.mxu0 %v1314
        %1707 = vmatmul.mubr.bf16.gmra.mxu0 %v1313
        %v1708 = vpop.f32.mrf.mxu0
        %v1709 = vadd.f32 %v1386, %v1708
        %v1710 = vpop.f32.mrf.mxu0
        %v1711 = vadd.f32 %v1390, %v1710
        %v1712 = vpop.f32.mrf.mxu0
        %v1713 = vadd.f32 %v1386, %v1712
        %v1714 = vpop.f32.mrf.mxu0
        %v1715 = vadd.f32 %v1390, %v1714
        %1716 = vmatprep.mubr.bf16.mxu0 %v1316
        %1717 = vmatmul.mubr.bf16.gmra.mxu0 %v1315
        %v1718 = vpop.f32.mrf.mxu0
        %v1719 = vadd.f32 %v1386, %v1718
        %v1720 = vpop.f32.mrf.mxu0
        %v1721 = vadd.f32 %v1390, %v1720
        %v1722 = vpop.f32.mrf.mxu0
        %v1723 = vadd.f32 %v1386, %v1722
        %v1724 = vpop.f32.mrf.mxu0
        %v1725 = vadd.f32 %v1390, %v1724
        %1726 = vdwg.mxu0
        %1727 = vmatprep.subr.bf16.mxu0 0
        %1728 = vmatpush1.bf16.msra.mxu0 %v1581
        %1729 = vmatprep.subr.bf16.mxu0 0
        %1730 = vmatpush1.bf16.msra.mxu0 %v1578
        %1731 = vmatprep.subr.bf16.mxu0 0
        %1732 = vmatpush1.bf16.msra.mxu0 %v1575
        %1733 = vmatprep.subr.bf16.mxu0 0
        %1734 = vmatpush1.bf16.msra.mxu0 %v1572
        %1735 = vmatprep.subr.bf16.mxu0 0
        %1736 = vmatpush1.bf16.msra.mxu0 %v1569
        %1737 = vmatprep.subr.bf16.mxu0 0
        %1738 = vmatpush1.bf16.msra.mxu0 %v1566
        %1739 = vmatprep.subr.bf16.mxu0 0
        %1740 = vmatpush1.bf16.msra.mxu0 %v1563
        %1741 = vmatprep.subr.bf16.mxu0 0
        %1742 = vmatpush1.bf16.msra.mxu0 %v1560
        %1743 = vmatprep.subr.bf16.mxu0 0
        %1744 = vmatpush2.bf16.msra.mxu0 %v1605
        %1745 = vmatprep.subr.bf16.mxu0 0
        %1746 = vmatpush2.bf16.msra.mxu0 %v1602
        %1747 = vmatprep.subr.bf16.mxu0 0
        %1748 = vmatpush2.bf16.msra.mxu0 %v1599
        %1749 = vmatprep.subr.bf16.mxu0 0
        %1750 = vmatpush2.bf16.msra.mxu0 %v1596
        %1751 = vmatprep.subr.bf16.mxu0 0
        %1752 = vmatpush2.bf16.msra.mxu0 %v1593
        %1753 = vmatprep.subr.bf16.mxu0 0
        %1754 = vmatpush2.bf16.msra.mxu0 %v1590
        %1755 = vmatprep.subr.bf16.mxu0 0
        %1756 = vmatpush2.bf16.msra.mxu0 %v1587
        %1757 = vmatprep.subr.bf16.mxu0 0
        %1758 = vmatpush2.bf16.msra.mxu0 %v1584
        %1759 = vmatprep.mubr.bf16.mxu0 %v1310
        %1760 = vmatmul.mubr.bf16.gmra.mxu0 %v1309
        %v1761 = vpop.f32.mrf.mxu0
        %v1762 = vadd.f32 %v1394, %v1761
        %v1763 = vpop.f32.mrf.mxu0
        %v1764 = vpop.f32.mrf.mxu0
        %v1765 = vadd.f32 %v1394, %v1764
        %v1766 = vpop.f32.mrf.mxu0
        %1767 = vmatprep.mubr.bf16.mxu0 %v1312
        %1768 = vmatmul.mubr.bf16.gmra.mxu0 %v1311
        %v1769 = vpop.f32.mrf.mxu0
        %v1770 = vadd.f32 %v1394, %v1769
        %v1771 = vpop.f32.mrf.mxu0
        %v1772 = vpop.f32.mrf.mxu0
        %v1773 = vadd.f32 %v1394, %v1772
        %v1774 = vpop.f32.mrf.mxu0
        %1775 = vmatprep.mubr.bf16.mxu0 %v1314
        %1776 = vmatmul.mubr.bf16.gmra.mxu0 %v1313
        %v1777 = vpop.f32.mrf.mxu0
        %v1778 = vadd.f32 %v1394, %v1777
        %v1779 = vpop.f32.mrf.mxu0
        %v1780 = vpop.f32.mrf.mxu0
        %v1781 = vadd.f32 %v1394, %v1780
        %v1782 = vpop.f32.mrf.mxu0
        %1783 = vmatprep.mubr.bf16.mxu0 %v1316
        %1784 = vmatmul.mubr.bf16.gmra.mxu0 %v1315
        %v1785 = vpop.f32.mrf.mxu0
        %v1786 = vadd.f32 %v1394, %v1785
        %v1787 = vpop.f32.mrf.mxu0
        %v1788 = vpop.f32.mrf.mxu0
        %v1789 = vadd.f32 %v1394, %v1788
        %v1790 = vpop.f32.mrf.mxu0
        %1791 = vdwg.mxu0
        %v1792 = vmax.f32 %v1689, %v1691
        %1793 = vmax.xlane.f32.xlu0 %v1792
        %v1794 = vpop.xlane.xlu0 %1793
        %v1795 = vmax.f32 %v1693, %v1695
        %1796 = vmax.xlane.f32.xlu0 %v1795
        %v1797 = vpop.xlane.xlu0 %1796
        %v1798 = vmax.f32 %v1699, %v1701
        %1799 = vmax.xlane.f32.xlu0 %v1798
        %v1800 = vpop.xlane.xlu0 %1799
        %v1801 = vmax.f32 %v1703, %v1705
        %1802 = vmax.xlane.f32.xlu0 %v1801
        %v1803 = vpop.xlane.xlu0 %1802
        %v1804 = vmax.f32 %v1709, %v1711
        %1805 = vmax.xlane.f32.xlu0 %v1804
        %v1806 = vpop.xlane.xlu0 %1805
        %v1807 = vmax.f32 %v1713, %v1715
        %1808 = vmax.xlane.f32.xlu0 %v1807
        %v1809 = vpop.xlane.xlu0 %1808
        %v1810 = vmax.f32 %v1719, %v1721
        %1811 = vmax.xlane.f32.xlu0 %v1810
        %v1812 = vpop.xlane.xlu0 %1811
        %v1813 = vmax.f32 %v1723, %v1725
        %1814 = vmax.xlane.f32.xlu0 %v1813
        %v1815 = vpop.xlane.xlu0 %1814
        %v1816 = vsub.f32 %v1689, %v1794
        %v1817 = vsub.f32 %v1691, %v1794
        %v1818 = vsub.f32 %v1693, %v1797
        %v1819 = vsub.f32 %v1695, %v1797
        %v1820 = vsub.f32 %v1699, %v1800
        %v1821 = vsub.f32 %v1701, %v1800
        %v1822 = vsub.f32 %v1703, %v1803
        %v1823 = vsub.f32 %v1705, %v1803
        %v1824 = vsub.f32 %v1709, %v1806
        %v1825 = vsub.f32 %v1711, %v1806
        %v1826 = vsub.f32 %v1713, %v1809
        %v1827 = vsub.f32 %v1715, %v1809
        %v1828 = vsub.f32 %v1719, %v1812
        %v1829 = vsub.f32 %v1721, %v1812
        %v1830 = vsub.f32 %v1723, %v1815
        %v1831 = vsub.f32 %v1725, %v1815
        %v1832 = vmul.f32 %v1816, 1.442695
        %v1833 = vpow.pop %v1832
        %v1834 = vmul.f32 %v1817, 1.442695
        %v1835 = vpow.pop %v1834
        %v1836 = vmul.f32 %v1818, 1.442695
        %v1837 = vpow.pop %v1836
        %v1838 = vmul.f32 %v1819, 1.442695
        %v1839 = vpow.pop %v1838
        %v1840 = vmul.f32 %v1820, 1.442695
        %v1841 = vpow.pop %v1840
        %v1842 = vmul.f32 %v1821, 1.442695
        %v1843 = vpow.pop %v1842
        %v1844 = vmul.f32 %v1822, 1.442695
        %v1845 = vpow.pop %v1844
        %v1846 = vmul.f32 %v1823, 1.442695
        %v1847 = vpow.pop %v1846
        %v1848 = vmul.f32 %v1824, 1.442695
        %v1849 = vpow.pop %v1848
        %v1850 = vmul.f32 %v1825, 1.442695
        %v1851 = vpow.pop %v1850
        %v1852 = vmul.f32 %v1826, 1.442695
        %v1853 = vpow.pop %v1852
        %v1854 = vmul.f32 %v1827, 1.442695
        %v1855 = vpow.pop %v1854
        %v1856 = vmul.f32 %v1828, 1.442695
        %v1857 = vpow.pop %v1856
        %v1858 = vmul.f32 %v1829, 1.442695
        %v1859 = vpow.pop %v1858
        %v1860 = vmul.f32 %v1830, 1.442695
        %v1861 = vpow.pop %v1860
        %v1862 = vmul.f32 %v1831, 1.442695
        %v1863 = vpow.pop %v1862
        %v1864 = vsub.f32 0.0, %v1762
        %v1865 = vsub.f32 0.0, %v1765
        %v1866 = vsub.f32 0.0, %v1770
        %v1867 = vsub.f32 0.0, %v1773
        %v1868 = vsub.f32 0.0, %v1778
        %v1869 = vsub.f32 0.0, %v1781
        %v1870 = vsub.f32 0.0, %v1786
        %v1871 = vsub.f32 0.0, %v1789
        %v1872 = vmul.f32 %v1864, 1.442695
        %v1873 = vpow.pop %v1872
        %v1874 = vmul.f32 %v1865, 1.442695
        %v1875 = vpow.pop %v1874
        %v1876 = vmul.f32 %v1866, 1.442695
        %v1877 = vpow.pop %v1876
        %v1878 = vmul.f32 %v1867, 1.442695
        %v1879 = vpow.pop %v1878
        %v1880 = vmul.f32 %v1868, 1.442695
        %v1881 = vpow.pop %v1880
        %v1882 = vmul.f32 %v1869, 1.442695
        %v1883 = vpow.pop %v1882
        %v1884 = vmul.f32 %v1870, 1.442695
        %v1885 = vpow.pop %v1884
        %v1886 = vmul.f32 %v1871, 1.442695
        %v1887 = vpow.pop %v1886
        %v1888 = vadd.f32 %v1873, 1.0
        %v1889 = vadd.f32 %v1875, 1.0
        %v1890 = vadd.f32 %v1877, 1.0
        %v1891 = vadd.f32 %v1879, 1.0
        %v1892 = vadd.f32 %v1881, 1.0
        %v1893 = vadd.f32 %v1883, 1.0
        %v1894 = vadd.f32 %v1885, 1.0
        %v1895 = vadd.f32 %v1887, 1.0
        %v1896 = vadd.f32 %v1833, %v1835
        %1897 = vadd.xlane.f32.xlu0 %v1896
        %v1898 = vpop.xlane.xlu0 %1897
        %v1899 = vadd.f32 %v1837, %v1839
        %1900 = vadd.xlane.f32.xlu0 %v1899
        %v1901 = vpop.xlane.xlu0 %1900
        %v1902 = vadd.f32 %v1841, %v1843
        %1903 = vadd.xlane.f32.xlu0 %v1902
        %v1904 = vpop.xlane.xlu0 %1903
        %v1905 = vadd.f32 %v1845, %v1847
        %1906 = vadd.xlane.f32.xlu0 %v1905
        %v1907 = vpop.xlane.xlu0 %1906
        %v1908 = vadd.f32 %v1849, %v1851
        %1909 = vadd.xlane.f32.xlu0 %v1908
        %v1910 = vpop.xlane.xlu0 %1909
        %v1911 = vadd.f32 %v1853, %v1855
        %1912 = vadd.xlane.f32.xlu0 %v1911
        %v1913 = vpop.xlane.xlu0 %1912
        %v1914 = vadd.f32 %v1857, %v1859
        %1915 = vadd.xlane.f32.xlu0 %v1914
        %v1916 = vpop.xlane.xlu0 %1915
        %v1917 = vadd.f32 %v1861, %v1863
        %1918 = vadd.xlane.f32.xlu0 %v1917
        %v1919 = vpop.xlane.xlu0 %1918
        %v1920 = vmul.f32 %v1888, %v1898
        %v1921 = vmul.f32 %v1889, %v1901
        %v1922 = vmul.f32 %v1890, %v1904
        %v1923 = vmul.f32 %v1891, %v1907
        %v1924 = vmul.f32 %v1892, %v1910
        %v1925 = vmul.f32 %v1893, %v1913
        %v1926 = vmul.f32 %v1894, %v1916
        %v1927 = vmul.f32 %v1895, %v1919
        %v1928 = vrcp.pop %v1920
        %v1929 = vrcp.pop %v1921
        %v1930 = vrcp.pop %v1922
        %v1931 = vrcp.pop %v1923
        %v1932 = vrcp.pop %v1924
        %v1933 = vrcp.pop %v1925
        %v1934 = vrcp.pop %v1926
        %v1935 = vrcp.pop %v1927
        %1937 = vset.pattern.permute.xlu0 0
        %1938 = vperm.xlu0 %1937, %v1928
        %v1939 = vpop.permute.xlu0 %1938
        %1942 = vset.pattern.permute.xlu0 0
        %1943 = vperm.xlu0 %1942, %v1929
        %v1944 = vpop.permute.xlu0 %1943
        %1947 = vset.pattern.permute.xlu0 0
        %1948 = vperm.xlu0 %1947, %v1930
        %v1949 = vpop.permute.xlu0 %1948
        %1952 = vset.pattern.permute.xlu0 0
        %1953 = vperm.xlu0 %1952, %v1931
        %v1954 = vpop.permute.xlu0 %1953
        %1957 = vset.pattern.permute.xlu0 0
        %1958 = vperm.xlu0 %1957, %v1932
        %v1959 = vpop.permute.xlu0 %1958
        %1962 = vset.pattern.permute.xlu0 0
        %1963 = vperm.xlu0 %1962, %v1933
        %v1964 = vpop.permute.xlu0 %1963
        %1967 = vset.pattern.permute.xlu0 0
        %1968 = vperm.xlu0 %1967, %v1934
        %v1969 = vpop.permute.xlu0 %1968
        %1972 = vset.pattern.permute.xlu0 0
        %1973 = vperm.xlu0 %1972, %v1935
        %v1974 = vpop.permute.xlu0 %1973
        %v1976 = vmul.f32 %v1833, %v1939
        %v1977 = vmul.f32 %v1835, %v1939
        %v1978 = vmul.f32 %v1837, %v1944
        %v1979 = vmul.f32 %v1839, %v1944
        %v1980 = vmul.f32 %v1841, %v1949
        %v1981 = vmul.f32 %v1843, %v1949
        %v1982 = vmul.f32 %v1845, %v1954
        %v1983 = vmul.f32 %v1847, %v1954
        %v1984 = vmul.f32 %v1849, %v1959
        %v1985 = vmul.f32 %v1851, %v1959
        %v1986 = vmul.f32 %v1853, %v1964
        %v1987 = vmul.f32 %v1855, %v1964
        %v1988 = vmul.f32 %v1857, %v1969
        %v1989 = vmul.f32 %v1859, %v1969
        %v1990 = vmul.f32 %v1861, %v1974
        %v1991 = vmul.f32 %v1863, %v1974
        %v1992 = vpack.c.bf16 %v1978, %v1976
        %v1993 = vpack.c.bf16 %v1979, %v1977
        %v1994 = vpack.c.bf16 %v1982, %v1980
        %v1995 = vpack.c.bf16 %v1983, %v1981
        %v1996 = vpack.c.bf16 %v1986, %v1984
        %v1997 = vpack.c.bf16 %v1987, %v1985
        %v1998 = vpack.c.bf16 %v1990, %v1988
        %v1999 = vpack.c.bf16 %v1991, %v1989
        %v2000 = vld [vmem:[%s303] sm:$0xf]
        %v2001 = vld [vmem:[%s303 + $0x4] sm:$0xf]
        %v2002 = vld [vmem:[%s303 + $0x8] sm:$0xf]
        %v2003 = vld [vmem:[%s303 + $0xc] sm:$0xf]
        %v2004 = vld [vmem:[%s303 + $0x10] sm:$0xf]
        %v2005 = vld [vmem:[%s303 + $0x14] sm:$0xf]
        %v2006 = vld [vmem:[%s303 + $0x18] sm:$0xf]
        %v2007 = vld [vmem:[%s303 + $0x1c] sm:$0xf]
        %v2008 = vld [vmem:[%s303 + $0x20] sm:$0xf]
        %v2009 = vld [vmem:[%s303 + $0x24] sm:$0xf]
        %v2010 = vld [vmem:[%s303 + $0x28] sm:$0xf]
        %v2011 = vld [vmem:[%s303 + $0x2c] sm:$0xf]
        %v2012 = vld [vmem:[%s303 + $0x30] sm:$0xf]
        %v2013 = vld [vmem:[%s303 + $0x34] sm:$0xf]
        %v2014 = vld [vmem:[%s303 + $0x38] sm:$0xf]
        %v2015 = vld [vmem:[%s303 + $0x3c] sm:$0xf]
        %v2016 = vld [vmem:[%s303 + $0x40] sm:$0xf]
        %v2017 = vld [vmem:[%s303 + $0x44] sm:$0xf]
        %v2018 = vld [vmem:[%s303 + $0x48] sm:$0xf]
        %v2019 = vld [vmem:[%s303 + $0x4c] sm:$0xf]
        %v2020 = vld [vmem:[%s303 + $0x50] sm:$0xf]
        %v2021 = vld [vmem:[%s303 + $0x54] sm:$0xf]
        %v2022 = vld [vmem:[%s303 + $0x58] sm:$0xf]
        %v2023 = vld [vmem:[%s303 + $0x5c] sm:$0xf]
        %v2024 = vld [vmem:[%s303 + $0x60] sm:$0xf]
        %v2025 = vld [vmem:[%s303 + $0x64] sm:$0xf]
        %v2026 = vld [vmem:[%s303 + $0x68] sm:$0xf]
        %v2027 = vld [vmem:[%s303 + $0x6c] sm:$0xf]
        %v2028 = vld [vmem:[%s303 + $0x70] sm:$0xf]
        %v2029 = vld [vmem:[%s303 + $0x74] sm:$0xf]
        %v2030 = vld [vmem:[%s303 + $0x78] sm:$0xf]
        %v2031 = vld [vmem:[%s303 + $0x7c] sm:$0xf]
        %v2064 = vunpack.c.l.b16 %v2000
        %v2065 = vunpack.c.l.b16 %v2001
        %v2066 = vunpack.c.l.b16 %v2002
        %v2067 = vunpack.c.l.b16 %v2003
        %v2068 = vunpack.c.l.b16 %v2004
        %v2069 = vunpack.c.l.b16 %v2005
        %v2070 = vunpack.c.l.b16 %v2006
        %v2071 = vunpack.c.l.b16 %v2007
        %v2072 = vunpack.c.l.b16 %v2008
        %v2073 = vunpack.c.l.b16 %v2009
        %v2074 = vunpack.c.l.b16 %v2010
        %v2075 = vunpack.c.l.b16 %v2011
        %v2076 = vunpack.c.l.b16 %v2012
        %v2077 = vunpack.c.l.b16 %v2013
        %v2078 = vunpack.c.l.b16 %v2014
        %v2079 = vunpack.c.l.b16 %v2015
        %v2080 = vunpack.c.l.b16 %v2016
        %v2081 = vunpack.c.l.b16 %v2017
        %v2082 = vunpack.c.l.b16 %v2018
        %v2083 = vunpack.c.l.b16 %v2019
        %v2084 = vunpack.c.l.b16 %v2020
        %v2085 = vunpack.c.l.b16 %v2021
        %v2086 = vunpack.c.l.b16 %v2022
        %v2087 = vunpack.c.l.b16 %v2023
        %v2088 = vunpack.c.l.b16 %v2024
        %v2089 = vunpack.c.l.b16 %v2025
        %v2090 = vunpack.c.l.b16 %v2026
        %v2091 = vunpack.c.l.b16 %v2027
        %v2092 = vunpack.c.l.b16 %v2028
        %v2093 = vunpack.c.l.b16 %v2029
        %v2094 = vunpack.c.l.b16 %v2030
        %v2095 = vunpack.c.l.b16 %v2031
        %v2096 = vpack.c.b16 %v2065, %v2064
        %v2097 = vpack.c.b16 %v2067, %v2066
        %v2098 = vpack.c.b16 %v2069, %v2068
        %v2099 = vpack.c.b16 %v2071, %v2070
        %v2100 = vpack.c.b16 %v2073, %v2072
        %v2101 = vpack.c.b16 %v2075, %v2074
        %v2102 = vpack.c.b16 %v2077, %v2076
        %v2103 = vpack.c.b16 %v2079, %v2078
        %v2104 = vpack.c.b16 %v2081, %v2080
        %v2105 = vpack.c.b16 %v2083, %v2082
        %v2106 = vpack.c.b16 %v2085, %v2084
        %v2107 = vpack.c.b16 %v2087, %v2086
        %v2108 = vpack.c.b16 %v2089, %v2088
        %v2109 = vpack.c.b16 %v2091, %v2090
        %v2110 = vpack.c.b16 %v2093, %v2092
        %v2111 = vpack.c.b16 %v2095, %v2094
        %2128 = vmatprep.subr.bf16.mxu0 0
        %2129 = vmatpush1.bf16.msra.mxu0 %v2103
        %2130 = vmatprep.subr.bf16.mxu0 0
        %2131 = vmatpush1.bf16.msra.mxu0 %v2102
        %2132 = vmatprep.subr.bf16.mxu0 0
        %2133 = vmatpush1.bf16.msra.mxu0 %v2101
        %2134 = vmatprep.subr.bf16.mxu0 0
        %2135 = vmatpush1.bf16.msra.mxu0 %v2100
        %2136 = vmatprep.subr.bf16.mxu0 0
        %2137 = vmatpush1.bf16.msra.mxu0 %v2099
        %2138 = vmatprep.subr.bf16.mxu0 0
        %2139 = vmatpush1.bf16.msra.mxu0 %v2098
        %2140 = vmatprep.subr.bf16.mxu0 0
        %2141 = vmatpush1.bf16.msra.mxu0 %v2097
        %2142 = vmatprep.subr.bf16.mxu0 0
        %2143 = vmatpush1.bf16.msra.mxu0 %v2096
        %2144 = vmatprep.subr.bf16.mxu0 0
        %2145 = vmatpush2.bf16.msra.mxu0 %v2111
        %2146 = vmatprep.subr.bf16.mxu0 0
        %2147 = vmatpush2.bf16.msra.mxu0 %v2110
        %2148 = vmatprep.subr.bf16.mxu0 0
        %2149 = vmatpush2.bf16.msra.mxu0 %v2109
        %2150 = vmatprep.subr.bf16.mxu0 0
        %2151 = vmatpush2.bf16.msra.mxu0 %v2108
        %2152 = vmatprep.subr.bf16.mxu0 0
        %2153 = vmatpush2.bf16.msra.mxu0 %v2107
        %2154 = vmatprep.subr.bf16.mxu0 0
        %2155 = vmatpush2.bf16.msra.mxu0 %v2106
        %2156 = vmatprep.subr.bf16.mxu0 0
        %2157 = vmatpush2.bf16.msra.mxu0 %v2105
        %2158 = vmatprep.subr.bf16.mxu0 0
        %2159 = vmatpush2.bf16.msra.mxu0 %v2104
        %2160 = vmatprep.mubr.bf16.mxu0 %v1993
        %2161 = vmatmul.mubr.bf16.gmra.mxu0 %v1992
        %v2162 = vpop.f32.mrf.mxu0
        %v2163 = vadd.f32 0.0, %v2162
        %v2164 = vpop.f32.mrf.mxu0
        %v2165 = vpop.f32.mrf.mxu0
        %v2166 = vadd.f32 0.0, %v2165
        %v2167 = vpop.f32.mrf.mxu0
        %2168 = vmatprep.mubr.bf16.mxu0 %v1995
        %2169 = vmatmul.mubr.bf16.gmra.mxu0 %v1994
        %v2170 = vpop.f32.mrf.mxu0
        %v2171 = vadd.f32 0.0, %v2170
        %v2172 = vpop.f32.mrf.mxu0
        %v2173 = vpop.f32.mrf.mxu0
        %v2174 = vadd.f32 0.0, %v2173
        %v2175 = vpop.f32.mrf.mxu0
        %2176 = vmatprep.mubr.bf16.mxu0 %v1997
        %2177 = vmatmul.mubr.bf16.gmra.mxu0 %v1996
        %v2178 = vpop.f32.mrf.mxu0
        %v2179 = vadd.f32 0.0, %v2178
        %v2180 = vpop.f32.mrf.mxu0
        %v2181 = vpop.f32.mrf.mxu0
        %v2182 = vadd.f32 0.0, %v2181
        %v2183 = vpop.f32.mrf.mxu0
        %2184 = vmatprep.mubr.bf16.mxu0 %v1999
        %2185 = vmatmul.mubr.bf16.gmra.mxu0 %v1998
        %v2186 = vpop.f32.mrf.mxu0
        %v2187 = vadd.f32 0.0, %v2186
        %v2188 = vpop.f32.mrf.mxu0
        %v2189 = vpop.f32.mrf.mxu0
        %v2190 = vadd.f32 0.0, %v2189
        %v2191 = vpop.f32.mrf.mxu0
        %2192 = vdwg.mxu0
        %2193 = vst [vmem:[%s342] sm:$0xff] %v2163
        %2194 = vst [vmem:[%s342 + $0x8] sm:$0xff] %v2166
        %2195 = vst [vmem:[%s342 + $0x10] sm:$0xff] %v2171
        %2196 = vst [vmem:[%s342 + $0x18] sm:$0xff] %v2174
        %2197 = vst [vmem:[%s342 + $0x20] sm:$0xff] %v2179
        %2198 = vst [vmem:[%s342 + $0x28] sm:$0xff] %v2182
        %2199 = vst [vmem:[%s342 + $0x30] sm:$0xff] %v2187
        %2200 = vst [vmem:[%s342 + $0x38] sm:$0xff] %v2190
        %s2201 = sand.u32 %s166, 1
        %s2202 = scalar_lea.sflag [#allocation4], %s2201
        %s2203 = sand.u32 %s166, 1
        %s2204 = smul.addr %s2203, 64
        %s2205 = scalar_lea.vmem [#allocation11], %s2204
        // Predicated region
        $region61: #{tpu_custom_call.1} parent=39 // pred_check
          %p2206 = pneg %p176
        $region62: #{tpu_custom_call.1} parent=39 // pred_check_branch
          %2208 = sbr.rel (%p2206) target = $region64
        $region63: #{tpu_custom_call.1} parent=39 // pred_region
          %s2209 = smul.u32 8, %s29
          %s2211 = ssub.s32 1024, 1024
          %2212 = vsyncadd %s2202, %s2211
          %s2213 = smul.addr %s28, 8
          %s2214 = sadd.s32 %s2209, %s2213
          %s2215 = smul.addr %s2214, 128
          %s2216 = scalar_lea.hbm %s5, %s2215
          %s2217 = sshll.u32 %s2205, 4
          %s2218 = int_to_ptr.vmem [resolvable:$true] %s2217
          %2223 = dma.vmem_to_hbm [thread:$0]  %s2218, 1024, %s2216, %s2202, 128, 128, 8
        $region64: #{tpu_custom_call.1} parent=39 // pred_fallthru
          _
      $region40: #{tpu_custom_call.1} parent=5 // pred_fallthru
        _
      %p2224 = scmp.le.s32.totalorder 2, %s19
      // Predicated region
      $region65: #{tpu_custom_call.1} parent=5 // pred_check
        %p2225 = pneg %p2224
      $region66: #{tpu_custom_call.1} parent=5 // pred_check_branch
        %2227 = sbr.rel (%p2225) target = $region68
      $region67: #{tpu_custom_call.1} parent=5 // pred_region
        %s2228 = ssub.s32 %s19, 2
        // Predicated region
        $region69: #{tpu_custom_call.1} parent=67 // pred_check
          %p2229 = pneg %p182
        $region70: #{tpu_custom_call.1} parent=67 // pred_check_branch
          %2231 = sbr.rel (%p2229) target = $region72
        $region71: #{tpu_custom_call.1} parent=67 // pred_region
          %s2232 = sand.u32 %s167, 1
          %s2233 = scalar_lea.sflag [#allocation4], %s2232
          %s2234 = sand.u32 %s167, 1
          %s2235 = smul.addr %s2234, 64
          %s2236 = scalar_lea.vmem [#allocation11], %s2235
          %2237 = dma.done %s2233, 1024
        $region72: #{tpu_custom_call.1} parent=67 // pred_fallthru
          _
      $region68: #{tpu_custom_call.1} parent=5 // pred_fallthru
        _
    $region6: #{tpu_custom_call.1} parent=1 // loop_footer
      %s23 = sadd.s32 1, %s19
    $region7: #{tpu_custom_call.1} parent=1 // loop_footer_branch
      %18 = sbr.rel target = $region3
    $region8: #{tpu_custom_call.1} parent=1 // loop_exit
      _
    %2238 = vsyncpa [#allocation3], 1
    %s2239 = scalar_lea.sflag [#allocation3], 1
    %2240 = vsyncpa %s2239, 1
    %2241 = vsyncpa [#allocation6], 1
    %s2242 = scalar_lea.sflag [#allocation6], 1
    %2243 = vsyncpa %s2242, 1
    %2244 = vsyncpa [#allocation9], 1
    %2245 = vsyncpa [#allocation4], 1
    %s2246 = scalar_lea.sflag [#allocation4], 1
    %2247 = vsyncpa %s2246, 1

</llo_original>
